<compile_context>
chip_gen: v7x
topology: tpu7x:2x2x1
jax: 0.10.0
libtpu: 0.0.40
codegen_flags: <defaults>
</compile_context>

<pallas_src>
import jax
import jax.numpy as jnp
import numpy as np
from jax.experimental import pallas as pl
from jax.experimental.pallas import tpu as pltpu


def _att_lstm_kernel(x_ref, wf_ref, bf_ref, whh_ref, wa_ref, ba_ref,
                     wp1_ref, bp1_ref, wp2_ref, bp2_ref, y_ref):
    S, B, Din = x_ref.shape
    H = whh_ref.shape[0]

    # ---- fused trans + input-to-gate projection, hoisted out of the loop ----
    # gates_x[s] = (x[s] @ w_trans + b_trans) @ w_ih + b_lstm, computed as one
    # (S*B, Din) @ (Din, 4H) matmul (weights pre-fused in the wrapper).
    x2 = x_ref[...].reshape(S * B, Din)
    gx = (jnp.dot(x2, wf_ref[...], preferred_element_type=jnp.float32)
          + bf_ref[...]).reshape(S, B, 4 * H)

    whh = whh_ref[...]                                # (H, 4H), hoisted

    h = jnp.zeros((B, H), jnp.float32)
    c = jnp.zeros((B, H), jnp.float32)
    h_steps = []

    # Fully unrolled recurrence (S is small & static): h/c stay in vregs.
    # TODO(synk): the only thing on the critical path is the serial h @ W_hh
    # chain; an explicit weight-stationary MXU drive (pltpu.matmul_push_rhs /
    # matmul_acc_lhs / matmul_pop) could avoid re-streaming W_hh 8 times, but
    # jnp.dot is kept here for lowering robustness at these sub-tile shapes.
    for s in range(S):
        gates = gx[s] + jnp.dot(h, whh, preferred_element_type=jnp.float32)  # (B, 4H)
        # Two full-vreg transcendentals instead of four quarter-vreg ones;
        # gate extraction is a lane select/shift on the otherwise-idle XLU.
        sig = jax.nn.sigmoid(gates)
        th = jnp.tanh(gates)
        i = sig[:, 0:H]
        f = sig[:, H:2 * H]
        g = th[:, 2 * H:3 * H]
        o = sig[:, 3 * H:4 * H]
        c = f * c + i * g
        h = o * jnp.tanh(c)
        h_steps.append(h)

    # ---- attention epilogue, batched over all timesteps (off the recurrence
    # critical path): score = tanh(Linear(H->1)), softmax over batch (dim=1),
    # context = weighted sum over batch.
    hs = jnp.stack(h_steps, axis=0)                                           # (S, B, H)
    sc = jnp.tanh(jnp.sum(hs * wa_ref[...], axis=-1, keepdims=True)
                  + ba_ref[...])                                              # (S, B, 1)
    # INVARIANT: scores come out of a Tanh, so they lie in [-1, 1] and exp()
    # cannot over/underflow -> no max-subtraction needed.  Revisit if the
    # attention scorer ever stops ending in Tanh.
    e = jnp.exp(sc)
    w = e * pl.reciprocal(jnp.sum(e, axis=1, keepdims=True), approx=True)     # (S, B, 1)
    ctx = jnp.sum(w * hs, axis=1)                                             # (S, H)

    # ---- predictor -----------------------------------------------------------
    # TODO(synk): Predictor class definition was not provided; assuming a
    # 2-layer MLP Linear(H,H) -> ReLU -> Linear(H, num_preds).
    hdn = jnp.maximum(
        jnp.dot(ctx, wp1_ref[...], preferred_element_type=jnp.float32) + bp1_ref[...],
        0.0)
    y_ref[...] = (jnp.dot(hdn, wp2_ref[...], preferred_element_type=jnp.float32)
                  + bp2_ref[...])


def att_lstm_forward(x, params):
    S, B, Din = x.shape
    H = params["w_hh"].shape[0]
    P = params["w_p2"].shape[1]

    # Fold the trans Linear into the LSTM input projection (both are affine):
    #   (x @ Wt + bt) @ Wih + bl  ==  x @ (Wt @ Wih) + (bt @ Wih + bl)
    w_fused = jnp.dot(params["w_trans"], params["w_ih"])                       # (Din, 4H)
    b_fused = jnp.dot(params["b_trans"], params["w_ih"]) + params["b_lstm"]    # (1, 4H)

    args = [x.astype(jnp.float32), w_fused, b_fused,
            params["w_hh"], params["w_attn"], params["b_attn"],
            params["w_p1"], params["b_p1"], params["w_p2"], params["b_p2"]]

    vmem_specs = [pl.BlockSpec(memory_space=pltpu.MemorySpace.VMEM)
                  for _ in range(len(args))]

    # Latency/overhead-bound kernel: total resident footprint ~50 KB, so no
    # grid/tiling/pipelining on any TPU generation; the 1 MiB limit documents
    # that.  The cost estimate keeps XLA from treating the call as expensive.
    flops = (2 * S * B * Din * 4 * H            # fused trans + input projection
             + 2 * S * B * H * 4 * H            # recurrent h @ W_hh
             + 2 * S * B * H                    # attention score dot
             + 2 * S * H * H + 2 * S * H * P)   # predictor MLP
    transcendentals = S * (2 * B * 4 * H + B * H) + 2 * S * B
    bytes_accessed = 4 * (x.size + w_fused.size + b_fused.size
                          + params["w_hh"].size + params["w_attn"].size
                          + params["b_attn"].size + params["w_p1"].size
                          + params["b_p1"].size + params["w_p2"].size
                          + params["b_p2"].size + S * P)

    # TODO(synk): for real throughput, batch many independent sequences and run
    # a leading "parallel" grid axis over sequence groups (fills sublanes and
    # both v7x TensorCores); out of scope for this single-forward module.
    return pl.pallas_call(
        _att_lstm_kernel,
        out_shape=jax.ShapeDtypeStruct((S, P), jnp.float32),
        in_specs=vmem_specs,
        out_specs=pl.BlockSpec(memory_space=pltpu.MemorySpace.VMEM),
        compiler_params=pltpu.CompilerParams(vmem_limit_bytes=1 * 1024 * 1024),
        cost_estimate=pl.CostEstimate(flops=flops,
                                      transcendentals=transcendentals,
                                      bytes_accessed=bytes_accessed),
    )(*args)


def reference_forward(x, p):
    """Pure-JAX reference mirroring the PyTorch semantics (unfused weights)."""
    x = x.astype(jnp.float32)
    S, B, Din = x.shape
    H = p["w_trans"].shape[1]
    t = x @ p["w_trans"] + p["b_trans"][0]
    h = jnp.zeros((B, H), jnp.float32)
    c = jnp.zeros((B, H), jnp.float32)
    outs = []
    for s in range(S):
        gates = t[s] @ p["w_ih"] + h @ p["w_hh"] + p["b_lstm"][0]
        i = jax.nn.sigmoid(gates[:, :H])
        f = jax.nn.sigmoid(gates[:, H:2 * H])
        g = jnp.tanh(gates[:, 2 * H:3 * H])
        o = jax.nn.sigmoid(gates[:, 3 * H:])
        c = f * c + i * g
        h = o * jnp.tanh(c)
        outs.append(h)
    out = jnp.stack(outs)                                          # (S, B, H)
    scores = jnp.tanh(jnp.sum(out * p["w_attn"][0][None, None, :], -1)
                      + p["b_attn"][0, 0])                         # (S, B)
    w = jax.nn.softmax(scores, axis=1)
    ctx = jnp.sum(w[:, :, None] * out, axis=1)                     # (S, H)
    hdn = jnp.maximum(ctx @ p["w_p1"] + p["b_p1"][0], 0.0)
    return hdn @ p["w_p2"] + p["b_p2"][0]


def make_params(key, input_size, hidden, num_preds):
    ks = jax.random.split(key, 12)
    f = lambda k, shape: (0.1 * jax.random.normal(k, shape)).astype(jnp.float32)
    H = hidden
    return {
        # trans: Linear(input_size, H); stored pre-transposed (in, out)
        "w_trans": f(ks[0], (input_size, H)),
        "b_trans": f(ks[1], (1, H)),
        # LSTM: W_ih / W_hh stored pre-transposed (in, 4H), PyTorch gate order i,f,g,o
        "w_ih": f(ks[2], (H, 4 * H)),
        "w_hh": f(ks[3], (H, 4 * H)),
        "b_lstm": f(ks[4], (1, 4 * H)),           # b_ih + b_hh combined
        # attention: Linear(H, 1) + Tanh
        "w_attn": f(ks[5], (1, H)),
        "b_attn": f(ks[6], (1, 1)),
        # predictor MLP
        "w_p1": f(ks[7], (H, H)),
        "b_p1": f(ks[8], (1, H)),
        "w_p2": f(ks[9], (H, num_preds)),
        "b_p2": f(ks[10], (1, num_preds)),
    }


if __name__ == "__main__":
    # Small shapes consistent with the module: seq=8, batch=2, input=16,
    # hidden_size = args.rank = 32, args.num_preds = 4.
    S, B, Din, H, P = 8, 2, 16, 32, 4

    key = jax.random.PRNGKey(0)
    kx, kp = jax.random.split(key)
    x = jax.random.normal(kx, (S, B, Din), dtype=jnp.float32)
    params = make_params(kp, Din, H, P)

    y = att_lstm_forward(x, params)
    jax.block_until_ready(y)

    y_ref = reference_forward(x, params)
    np.testing.assert_allclose(np.asarray(y), np.asarray(y_ref),
                               rtol=1e-2, atol=1e-2)

    assert y.shape == (S, P)
    print("KERNEL_OK")
</pallas_src>

<mosaic_0001>
module attributes {stable_mosaic.version = 11 : i64} {
  func.func @_att_lstm_kernel(%arg0: memref<8x2x16xf32, #tpu.memory_space<vmem>>, %arg1: memref<16x128xf32, #tpu.memory_space<vmem>>, %arg2: memref<1x128xf32, #tpu.memory_space<vmem>>, %arg3: memref<32x128xf32, #tpu.memory_space<vmem>>, %arg4: memref<1x32xf32, #tpu.memory_space<vmem>>, %arg5: memref<1x1xf32, #tpu.memory_space<vmem>>, %arg6: memref<32x32xf32, #tpu.memory_space<vmem>>, %arg7: memref<1x32xf32, #tpu.memory_space<vmem>>, %arg8: memref<32x4xf32, #tpu.memory_space<vmem>>, %arg9: memref<1x4xf32, #tpu.memory_space<vmem>>, %arg10: memref<8x4xf32, #tpu.memory_space<vmem>>) attributes {dimension_semantics = [], scalar_prefetch = 0 : i64, scratch_operands = 0 : i64, tpu.core_type = #tpu.core_type<tc>} {
    %c0 = arith.constant 0 : index
    %c0_0 = arith.constant 0 : index
    %c0_1 = arith.constant 0 : index
    %0 = vector.load %arg0[%c0, %c0_0, %c0_1] : memref<8x2x16xf32, #tpu.memory_space<vmem>>, vector<8x2x16xf32>
    %1 = vector.shape_cast %0 : vector<8x2x16xf32> to vector<16x16xf32>
    %c0_2 = arith.constant 0 : index
    %c0_3 = arith.constant 0 : index
    %2 = vector.load %arg1[%c0_2, %c0_3] : memref<16x128xf32, #tpu.memory_space<vmem>>, vector<16x128xf32>
    %cst = arith.constant dense<0.000000e+00> : vector<16x128xf32>
    %3 = tpu.matmul %1, %2, %cst {dimension_numbers = #tpu.dot_dimension_numbers<[1], [0], [0], [1], [0, 0, 1, 1], [], []>} : vector<16x16xf32>, vector<16x128xf32>, vector<16x128xf32> -> vector<16x128xf32>
    %c0_4 = arith.constant 0 : index
    %c0_5 = arith.constant 0 : index
    %4 = vector.load %arg2[%c0_4, %c0_5] : memref<1x128xf32, #tpu.memory_space<vmem>>, vector<1x128xf32>
    %5 = vector.broadcast %4 : vector<1x128xf32> to vector<16x128xf32>
    %6 = arith.addf %3, %5 : vector<16x128xf32>
    %7 = vector.shape_cast %6 : vector<16x128xf32> to vector<8x2x128xf32>
    %c0_6 = arith.constant 0 : index
    %c0_7 = arith.constant 0 : index
    %8 = vector.load %arg3[%c0_6, %c0_7] : memref<32x128xf32, #tpu.memory_space<vmem>>, vector<32x128xf32>
    %cst_8 = arith.constant 0.000000e+00 : f32
    %9 = vector.broadcast %cst_8 : f32 to vector<2x32xf32>
    %cst_9 = arith.constant 0.000000e+00 : f32
    %10 = vector.broadcast %cst_9 : f32 to vector<2x32xf32>
    %11 = vector.extract_strided_slice %7 {offsets = [0, 0, 0], sizes = [1, 2, 128], strides = [1, 1, 1]} : vector<8x2x128xf32> to vector<1x2x128xf32>
    %12 = vector.shape_cast %11 : vector<1x2x128xf32> to vector<2x128xf32>
    %cst_10 = arith.constant dense<0.000000e+00> : vector<2x128xf32>
    %13 = tpu.matmul %9, %8, %cst_10 {dimension_numbers = #tpu.dot_dimension_numbers<[1], [0], [0], [1], [0, 0, 1, 1], [], []>} : vector<2x32xf32>, vector<32x128xf32>, vector<2x128xf32> -> vector<2x128xf32>
    %14 = arith.addf %12, %13 : vector<2x128xf32>
    %15 = arith.negf %14 : vector<2x128xf32>
    %16 = math.exp %15 : vector<2x128xf32>
    %cst_11 = arith.constant 1.000000e+00 : f32
    %17 = vector.broadcast %cst_11 : f32 to vector<2x128xf32>
    %18 = arith.addf %17, %16 : vector<2x128xf32>
    %19 = arith.divf %17, %18 : vector<2x128xf32>
    %20 = math.tanh %14 : vector<2x128xf32>
    %21 = vector.extract_strided_slice %19 {offsets = [0, 0], sizes = [2, 32], strides = [1, 1]} : vector<2x128xf32> to vector<2x32xf32>
    %22 = vector.extract_strided_slice %19 {offsets = [0, 32], sizes = [2, 32], strides = [1, 1]} : vector<2x128xf32> to vector<2x32xf32>
    %23 = vector.extract_strided_slice %20 {offsets = [0, 64], sizes = [2, 32], strides = [1, 1]} : vector<2x128xf32> to vector<2x32xf32>
    %24 = vector.extract_strided_slice %19 {offsets = [0, 96], sizes = [2, 32], strides = [1, 1]} : vector<2x128xf32> to vector<2x32xf32>
    %25 = arith.mulf %22, %10 : vector<2x32xf32>
    %26 = arith.mulf %21, %23 : vector<2x32xf32>
    %27 = arith.addf %25, %26 : vector<2x32xf32>
    %28 = math.tanh %27 : vector<2x32xf32>
    %29 = arith.mulf %24, %28 : vector<2x32xf32>
    %30 = vector.extract_strided_slice %7 {offsets = [1, 0, 0], sizes = [1, 2, 128], strides = [1, 1, 1]} : vector<8x2x128xf32> to vector<1x2x128xf32>
    %31 = vector.shape_cast %30 : vector<1x2x128xf32> to vector<2x128xf32>
    %cst_12 = arith.constant dense<0.000000e+00> : vector<2x128xf32>
    %32 = tpu.matmul %29, %8, %cst_12 {dimension_numbers = #tpu.dot_dimension_numbers<[1], [0], [0], [1], [0, 0, 1, 1], [], []>} : vector<2x32xf32>, vector<32x128xf32>, vector<2x128xf32> -> vector<2x128xf32>
    %33 = arith.addf %31, %32 : vector<2x128xf32>
    %34 = arith.negf %33 : vector<2x128xf32>
    %35 = math.exp %34 : vector<2x128xf32>
    %cst_13 = arith.constant 1.000000e+00 : f32
    %36 = vector.broadcast %cst_13 : f32 to vector<2x128xf32>
    %37 = arith.addf %36, %35 : vector<2x128xf32>
    %38 = arith.divf %36, %37 : vector<2x128xf32>
    %39 = math.tanh %33 : vector<2x128xf32>
    %40 = vector.extract_strided_slice %38 {offsets = [0, 0], sizes = [2, 32], strides = [1, 1]} : vector<2x128xf32> to vector<2x32xf32>
    %41 = vector.extract_strided_slice %38 {offsets = [0, 32], sizes = [2, 32], strides = [1, 1]} : vector<2x128xf32> to vector<2x32xf32>
    %42 = vector.extract_strided_slice %39 {offsets = [0, 64], sizes = [2, 32], strides = [1, 1]} : vector<2x128xf32> to vector<2x32xf32>
    %43 = vector.extract_strided_slice %38 {offsets = [0, 96], sizes = [2, 32], strides = [1, 1]} : vector<2x128xf32> to vector<2x32xf32>
    %44 = arith.mulf %41, %27 : vector<2x32xf32>
    %45 = arith.mulf %40, %42 : vector<2x32xf32>
    %46 = arith.addf %44, %45 : vector<2x32xf32>
    %47 = math.tanh %46 : vector<2x32xf32>
    %48 = arith.mulf %43, %47 : vector<2x32xf32>
    %49 = vector.extract_strided_slice %7 {offsets = [2, 0, 0], sizes = [1, 2, 128], strides = [1, 1, 1]} : vector<8x2x128xf32> to vector<1x2x128xf32>
    %50 = vector.shape_cast %49 : vector<1x2x128xf32> to vector<2x128xf32>
    %cst_14 = arith.constant dense<0.000000e+00> : vector<2x128xf32>
    %51 = tpu.matmul %48, %8, %cst_14 {dimension_numbers = #tpu.dot_dimension_numbers<[1], [0], [0], [1], [0, 0, 1, 1], [], []>} : vector<2x32xf32>, vector<32x128xf32>, vector<2x128xf32> -> vector<2x128xf32>
    %52 = arith.addf %50, %51 : vector<2x128xf32>
    %53 = arith.negf %52 : vector<2x128xf32>
    %54 = math.exp %53 : vector<2x128xf32>
    %cst_15 = arith.constant 1.000000e+00 : f32
    %55 = vector.broadcast %cst_15 : f32 to vector<2x128xf32>
    %56 = arith.addf %55, %54 : vector<2x128xf32>
    %57 = arith.divf %55, %56 : vector<2x128xf32>
    %58 = math.tanh %52 : vector<2x128xf32>
    %59 = vector.extract_strided_slice %57 {offsets = [0, 0], sizes = [2, 32], strides = [1, 1]} : vector<2x128xf32> to vector<2x32xf32>
    %60 = vector.extract_strided_slice %57 {offsets = [0, 32], sizes = [2, 32], strides = [1, 1]} : vector<2x128xf32> to vector<2x32xf32>
    %61 = vector.extract_strided_slice %58 {offsets = [0, 64], sizes = [2, 32], strides = [1, 1]} : vector<2x128xf32> to vector<2x32xf32>
    %62 = vector.extract_strided_slice %57 {offsets = [0, 96], sizes = [2, 32], strides = [1, 1]} : vector<2x128xf32> to vector<2x32xf32>
    %63 = arith.mulf %60, %46 : vector<2x32xf32>
    %64 = arith.mulf %59, %61 : vector<2x32xf32>
    %65 = arith.addf %63, %64 : vector<2x32xf32>
    %66 = math.tanh %65 : vector<2x32xf32>
    %67 = arith.mulf %62, %66 : vector<2x32xf32>
    %68 = vector.extract_strided_slice %7 {offsets = [3, 0, 0], sizes = [1, 2, 128], strides = [1, 1, 1]} : vector<8x2x128xf32> to vector<1x2x128xf32>
    %69 = vector.shape_cast %68 : vector<1x2x128xf32> to vector<2x128xf32>
    %cst_16 = arith.constant dense<0.000000e+00> : vector<2x128xf32>
    %70 = tpu.matmul %67, %8, %cst_16 {dimension_numbers = #tpu.dot_dimension_numbers<[1], [0], [0], [1], [0, 0, 1, 1], [], []>} : vector<2x32xf32>, vector<32x128xf32>, vector<2x128xf32> -> vector<2x128xf32>
    %71 = arith.addf %69, %70 : vector<2x128xf32>
    %72 = arith.negf %71 : vector<2x128xf32>
    %73 = math.exp %72 : vector<2x128xf32>
    %cst_17 = arith.constant 1.000000e+00 : f32
    %74 = vector.broadcast %cst_17 : f32 to vector<2x128xf32>
    %75 = arith.addf %74, %73 : vector<2x128xf32>
    %76 = arith.divf %74, %75 : vector<2x128xf32>
    %77 = math.tanh %71 : vector<2x128xf32>
    %78 = vector.extract_strided_slice %76 {offsets = [0, 0], sizes = [2, 32], strides = [1, 1]} : vector<2x128xf32> to vector<2x32xf32>
    %79 = vector.extract_strided_slice %76 {offsets = [0, 32], sizes = [2, 32], strides = [1, 1]} : vector<2x128xf32> to vector<2x32xf32>
    %80 = vector.extract_strided_slice %77 {offsets = [0, 64], sizes = [2, 32], strides = [1, 1]} : vector<2x128xf32> to vector<2x32xf32>
    %81 = vector.extract_strided_slice %76 {offsets = [0, 96], sizes = [2, 32], strides = [1, 1]} : vector<2x128xf32> to vector<2x32xf32>
    %82 = arith.mulf %79, %65 : vector<2x32xf32>
    %83 = arith.mulf %78, %80 : vector<2x32xf32>
    %84 = arith.addf %82, %83 : vector<2x32xf32>
    %85 = math.tanh %84 : vector<2x32xf32>
    %86 = arith.mulf %81, %85 : vector<2x32xf32>
    %87 = vector.extract_strided_slice %7 {offsets = [4, 0, 0], sizes = [1, 2, 128], strides = [1, 1, 1]} : vector<8x2x128xf32> to vector<1x2x128xf32>
    %88 = vector.shape_cast %87 : vector<1x2x128xf32> to vector<2x128xf32>
    %cst_18 = arith.constant dense<0.000000e+00> : vector<2x128xf32>
    %89 = tpu.matmul %86, %8, %cst_18 {dimension_numbers = #tpu.dot_dimension_numbers<[1], [0], [0], [1], [0, 0, 1, 1], [], []>} : vector<2x32xf32>, vector<32x128xf32>, vector<2x128xf32> -> vector<2x128xf32>
    %90 = arith.addf %88, %89 : vector<2x128xf32>
    %91 = arith.negf %90 : vector<2x128xf32>
    %92 = math.exp %91 : vector<2x128xf32>
    %cst_19 = arith.constant 1.000000e+00 : f32
    %93 = vector.broadcast %cst_19 : f32 to vector<2x128xf32>
    %94 = arith.addf %93, %92 : vector<2x128xf32>
    %95 = arith.divf %93, %94 : vector<2x128xf32>
    %96 = math.tanh %90 : vector<2x128xf32>
    %97 = vector.extract_strided_slice %95 {offsets = [0, 0], sizes = [2, 32], strides = [1, 1]} : vector<2x128xf32> to vector<2x32xf32>
    %98 = vector.extract_strided_slice %95 {offsets = [0, 32], sizes = [2, 32], strides = [1, 1]} : vector<2x128xf32> to vector<2x32xf32>
    %99 = vector.extract_strided_slice %96 {offsets = [0, 64], sizes = [2, 32], strides = [1, 1]} : vector<2x128xf32> to vector<2x32xf32>
    %100 = vector.extract_strided_slice %95 {offsets = [0, 96], sizes = [2, 32], strides = [1, 1]} : vector<2x128xf32> to vector<2x32xf32>
    %101 = arith.mulf %98, %84 : vector<2x32xf32>
    %102 = arith.mulf %97, %99 : vector<2x32xf32>
    %103 = arith.addf %101, %102 : vector<2x32xf32>
    %104 = math.tanh %103 : vector<2x32xf32>
    %105 = arith.mulf %100, %104 : vector<2x32xf32>
    %106 = vector.extract_strided_slice %7 {offsets = [5, 0, 0], sizes = [1, 2, 128], strides = [1, 1, 1]} : vector<8x2x128xf32> to vector<1x2x128xf32>
    %107 = vector.shape_cast %106 : vector<1x2x128xf32> to vector<2x128xf32>
    %cst_20 = arith.constant dense<0.000000e+00> : vector<2x128xf32>
    %108 = tpu.matmul %105, %8, %cst_20 {dimension_numbers = #tpu.dot_dimension_numbers<[1], [0], [0], [1], [0, 0, 1, 1], [], []>} : vector<2x32xf32>, vector<32x128xf32>, vector<2x128xf32> -> vector<2x128xf32>
    %109 = arith.addf %107, %108 : vector<2x128xf32>
    %110 = arith.negf %109 : vector<2x128xf32>
    %111 = math.exp %110 : vector<2x128xf32>
    %cst_21 = arith.constant 1.000000e+00 : f32
    %112 = vector.broadcast %cst_21 : f32 to vector<2x128xf32>
    %113 = arith.addf %112, %111 : vector<2x128xf32>
    %114 = arith.divf %112, %113 : vector<2x128xf32>
    %115 = math.tanh %109 : vector<2x128xf32>
    %116 = vector.extract_strided_slice %114 {offsets = [0, 0], sizes = [2, 32], strides = [1, 1]} : vector<2x128xf32> to vector<2x32xf32>
    %117 = vector.extract_strided_slice %114 {offsets = [0, 32], sizes = [2, 32], strides = [1, 1]} : vector<2x128xf32> to vector<2x32xf32>
    %118 = vector.extract_strided_slice %115 {offsets = [0, 64], sizes = [2, 32], strides = [1, 1]} : vector<2x128xf32> to vector<2x32xf32>
    %119 = vector.extract_strided_slice %114 {offsets = [0, 96], sizes = [2, 32], strides = [1, 1]} : vector<2x128xf32> to vector<2x32xf32>
    %120 = arith.mulf %117, %103 : vector<2x32xf32>
    %121 = arith.mulf %116, %118 : vector<2x32xf32>
    %122 = arith.addf %120, %121 : vector<2x32xf32>
    %123 = math.tanh %122 : vector<2x32xf32>
    %124 = arith.mulf %119, %123 : vector<2x32xf32>
    %125 = vector.extract_strided_slice %7 {offsets = [6, 0, 0], sizes = [1, 2, 128], strides = [1, 1, 1]} : vector<8x2x128xf32> to vector<1x2x128xf32>
    %126 = vector.shape_cast %125 : vector<1x2x128xf32> to vector<2x128xf32>
    %cst_22 = arith.constant dense<0.000000e+00> : vector<2x128xf32>
    %127 = tpu.matmul %124, %8, %cst_22 {dimension_numbers = #tpu.dot_dimension_numbers<[1], [0], [0], [1], [0, 0, 1, 1], [], []>} : vector<2x32xf32>, vector<32x128xf32>, vector<2x128xf32> -> vector<2x128xf32>
    %128 = arith.addf %126, %127 : vector<2x128xf32>
    %129 = arith.negf %128 : vector<2x128xf32>
    %130 = math.exp %129 : vector<2x128xf32>
    %cst_23 = arith.constant 1.000000e+00 : f32
    %131 = vector.broadcast %cst_23 : f32 to vector<2x128xf32>
    %132 = arith.addf %131, %130 : vector<2x128xf32>
    %133 = arith.divf %131, %132 : vector<2x128xf32>
    %134 = math.tanh %128 : vector<2x128xf32>
    %135 = vector.extract_strided_slice %133 {offsets = [0, 0], sizes = [2, 32], strides = [1, 1]} : vector<2x128xf32> to vector<2x32xf32>
    %136 = vector.extract_strided_slice %133 {offsets = [0, 32], sizes = [2, 32], strides = [1, 1]} : vector<2x128xf32> to vector<2x32xf32>
    %137 = vector.extract_strided_slice %134 {offsets = [0, 64], sizes = [2, 32], strides = [1, 1]} : vector<2x128xf32> to vector<2x32xf32>
    %138 = vector.extract_strided_slice %133 {offsets = [0, 96], sizes = [2, 32], strides = [1, 1]} : vector<2x128xf32> to vector<2x32xf32>
    %139 = arith.mulf %136, %122 : vector<2x32xf32>
    %140 = arith.mulf %135, %137 : vector<2x32xf32>
    %141 = arith.addf %139, %140 : vector<2x32xf32>
    %142 = math.tanh %141 : vector<2x32xf32>
    %143 = arith.mulf %138, %142 : vector<2x32xf32>
    %144 = vector.extract_strided_slice %7 {offsets = [7, 0, 0], sizes = [1, 2, 128], strides = [1, 1, 1]} : vector<8x2x128xf32> to vector<1x2x128xf32>
    %145 = vector.shape_cast %144 : vector<1x2x128xf32> to vector<2x128xf32>
    %cst_24 = arith.constant dense<0.000000e+00> : vector<2x128xf32>
    %146 = tpu.matmul %143, %8, %cst_24 {dimension_numbers = #tpu.dot_dimension_numbers<[1], [0], [0], [1], [0, 0, 1, 1], [], []>} : vector<2x32xf32>, vector<32x128xf32>, vector<2x128xf32> -> vector<2x128xf32>
    %147 = arith.addf %145, %146 : vector<2x128xf32>
    %148 = arith.negf %147 : vector<2x128xf32>
    %149 = math.exp %148 : vector<2x128xf32>
    %cst_25 = arith.constant 1.000000e+00 : f32
    %150 = vector.broadcast %cst_25 : f32 to vector<2x128xf32>
    %151 = arith.addf %150, %149 : vector<2x128xf32>
    %152 = arith.divf %150, %151 : vector<2x128xf32>
    %153 = math.tanh %147 : vector<2x128xf32>
    %154 = vector.extract_strided_slice %152 {offsets = [0, 0], sizes = [2, 32], strides = [1, 1]} : vector<2x128xf32> to vector<2x32xf32>
    %155 = vector.extract_strided_slice %152 {offsets = [0, 32], sizes = [2, 32], strides = [1, 1]} : vector<2x128xf32> to vector<2x32xf32>
    %156 = vector.extract_strided_slice %153 {offsets = [0, 64], sizes = [2, 32], strides = [1, 1]} : vector<2x128xf32> to vector<2x32xf32>
    %157 = vector.extract_strided_slice %152 {offsets = [0, 96], sizes = [2, 32], strides = [1, 1]} : vector<2x128xf32> to vector<2x32xf32>
    %158 = arith.mulf %155, %141 : vector<2x32xf32>
    %159 = arith.mulf %154, %156 : vector<2x32xf32>
    %160 = arith.addf %158, %159 : vector<2x32xf32>
    %161 = math.tanh %160 : vector<2x32xf32>
    %162 = arith.mulf %157, %161 : vector<2x32xf32>
    %163 = vector.shape_cast %29 : vector<2x32xf32> to vector<1x2x32xf32>
    %164 = vector.shape_cast %48 : vector<2x32xf32> to vector<1x2x32xf32>
    %165 = vector.shape_cast %67 : vector<2x32xf32> to vector<1x2x32xf32>
    %166 = vector.shape_cast %86 : vector<2x32xf32> to vector<1x2x32xf32>
    %167 = vector.shape_cast %105 : vector<2x32xf32> to vector<1x2x32xf32>
    %168 = vector.shape_cast %124 : vector<2x32xf32> to vector<1x2x32xf32>
    %169 = vector.shape_cast %143 : vector<2x32xf32> to vector<1x2x32xf32>
    %170 = vector.shape_cast %162 : vector<2x32xf32> to vector<1x2x32xf32>
    %171 = tpu.concatenate %163, %164, %165, %166, %167, %168, %169, %170 in 0 : vector<1x2x32xf32>, vector<1x2x32xf32>, vector<1x2x32xf32>, vector<1x2x32xf32>, vector<1x2x32xf32>, vector<1x2x32xf32>, vector<1x2x32xf32>, vector<1x2x32xf32> -> vector<8x2x32xf32>
    %c0_26 = arith.constant 0 : index
    %c0_27 = arith.constant 0 : index
    %172 = vector.load %arg4[%c0_26, %c0_27] : memref<1x32xf32, #tpu.memory_space<vmem>>, vector<1x32xf32>
    %173 = vector.shape_cast %172 : vector<1x32xf32> to vector<1x1x32xf32>
    %174 = vector.broadcast %173 : vector<1x1x32xf32> to vector<8x2x32xf32>
    %175 = arith.mulf %171, %174 : vector<8x2x32xf32>
    %cst_28 = arith.constant dense<0.000000e+00> : vector<8x2xf32>
    %176 = vector.multi_reduction <add>, %175, %cst_28 [2] : vector<8x2x32xf32> to vector<8x2xf32>
    %177 = vector.shape_cast %176 : vector<8x2xf32> to vector<8x2x1xf32>
    %c0_29 = arith.constant 0 : index
    %c0_30 = arith.constant 0 : index
    %178 = vector.load %arg5[%c0_29, %c0_30] : memref<1x1xf32, #tpu.memory_space<vmem>>, vector<1x1xf32>
    %179 = vector.shape_cast %178 : vector<1x1xf32> to vector<1x1x1xf32>
    %180 = vector.broadcast %179 : vector<1x1x1xf32> to vector<8x2x1xf32>
    %181 = arith.addf %177, %180 : vector<8x2x1xf32>
    %182 = math.tanh %181 : vector<8x2x1xf32>
    %183 = math.exp %182 : vector<8x2x1xf32>
    %cst_31 = arith.constant dense<0.000000e+00> : vector<8x1xf32>
    %184 = vector.multi_reduction <add>, %183, %cst_31 [1] : vector<8x2x1xf32> to vector<8x1xf32>
    %185 = vector.shape_cast %184 : vector<8x1xf32> to vector<8x1x1xf32>
    %186 = tpu.reciprocal %185 {approx = true} : vector<8x1x1xf32> -> vector<8x1x1xf32>
    %187 = vector.broadcast %186 : vector<8x1x1xf32> to vector<8x2x1xf32>
    %188 = arith.mulf %183, %187 : vector<8x2x1xf32>
    %189 = vector.broadcast %188 : vector<8x2x1xf32> to vector<8x2x32xf32>
    %190 = arith.mulf %189, %171 : vector<8x2x32xf32>
    %cst_32 = arith.constant dense<0.000000e+00> : vector<8x32xf32>
    %191 = vector.multi_reduction <add>, %190, %cst_32 [1] : vector<8x2x32xf32> to vector<8x32xf32>
    %c0_33 = arith.constant 0 : index
    %c0_34 = arith.constant 0 : index
    %192 = vector.load %arg6[%c0_33, %c0_34] : memref<32x32xf32, #tpu.memory_space<vmem>>, vector<32x32xf32>
    %cst_35 = arith.constant dense<0.000000e+00> : vector<8x32xf32>
    %193 = tpu.matmul %191, %192, %cst_35 {dimension_numbers = #tpu.dot_dimension_numbers<[1], [0], [0], [1], [0, 0, 1, 1], [], []>} : vector<8x32xf32>, vector<32x32xf32>, vector<8x32xf32> -> vector<8x32xf32>
    %c0_36 = arith.constant 0 : index
    %c0_37 = arith.constant 0 : index
    %194 = vector.load %arg7[%c0_36, %c0_37] : memref<1x32xf32, #tpu.memory_space<vmem>>, vector<1x32xf32>
    %195 = vector.broadcast %194 : vector<1x32xf32> to vector<8x32xf32>
    %196 = arith.addf %193, %195 : vector<8x32xf32>
    %cst_38 = arith.constant 0.000000e+00 : f32
    %197 = vector.broadcast %cst_38 : f32 to vector<8x32xf32>
    %198 = arith.maximumf %196, %197 : vector<8x32xf32>
    %c0_39 = arith.constant 0 : index
    %c0_40 = arith.constant 0 : index
    %199 = vector.load %arg8[%c0_39, %c0_40] : memref<32x4xf32, #tpu.memory_space<vmem>>, vector<32x4xf32>
    %cst_41 = arith.constant dense<0.000000e+00> : vector<8x4xf32>
    %200 = tpu.matmul %198, %199, %cst_41 {dimension_numbers = #tpu.dot_dimension_numbers<[1], [0], [0], [1], [0, 0, 1, 1], [], []>} : vector<8x32xf32>, vector<32x4xf32>, vector<8x4xf32> -> vector<8x4xf32>
    %c0_42 = arith.constant 0 : index
    %c0_43 = arith.constant 0 : index
    %201 = vector.load %arg9[%c0_42, %c0_43] : memref<1x4xf32, #tpu.memory_space<vmem>>, vector<1x4xf32>
    %202 = vector.broadcast %201 : vector<1x4xf32> to vector<8x4xf32>
    %203 = arith.addf %200, %202 : vector<8x4xf32>
    %c0_44 = arith.constant 0 : index
    %c0_45 = arith.constant 0 : index
    %204 = vector.load %arg10[%c0_44, %c0_45] : memref<8x4xf32, #tpu.memory_space<vmem>>, vector<8x4xf32>
    tpu.vector_store %arg10[%c0_44, %c0_45], %203 {strides = array<i32>} : memref<8x4xf32, #tpu.memory_space<vmem>>, vector<8x4xf32>,
    return
  }
}

</mosaic_0001>

<llo_original>
// kernel: tpu_custom_call.1
$region0: #{tpu_custom_call.1}
  #allocation0 [shape = 'u32[]', space=smem, size = 0x4, offset = 0x4, fixed_abs, tag = 'smem constant byte address 0x4 - core index']
  #allocation1 [shape = 'u32[144,128]{1,0:T(1,128)}', space=vmem, size = 0x12000, scoped, tag = 'internal scratch']
  #allocation2 [shape = 'f32[1,1]{1,0:T(1,128)S(1)}', space=vmem, size = 0x200, scoped, tag = 'scoped memory for tpu_custom_call.1']
  %s0 = inlined_call_operand.vmem [shape: f32[8,2,16], index: 0, kind: input, shape index: {}]
  %s1 = inlined_call_operand.hbm [shape: f32[16,128], index: 1, kind: input, shape index: {}]
  %s2 = inlined_call_operand.vmem [shape: f32[1,128], index: 2, kind: input, shape index: {}]
  %s3 = inlined_call_operand.vmem [shape: f32[32,128], index: 3, kind: input, shape index: {}]
  %s4 = inlined_call_operand.vmem [shape: f32[1,32], index: 4, kind: input, shape index: {}]
  %s5 = inlined_call_operand.<no memory space> [shape: f32[1,1], index: 5, kind: input, shape index: {}]
  %s6 = inlined_call_operand.hbm [shape: f32[32,32], index: 6, kind: input, shape index: {}]
  %s7 = inlined_call_operand.vmem [shape: f32[1,32], index: 7, kind: input, shape index: {}]
  %s8 = inlined_call_operand.vmem [shape: f32[32,4], index: 8, kind: input, shape index: {}]
  %s9 = inlined_call_operand.vmem [shape: f32[1,4], index: 9, kind: input, shape index: {}]
  %s10 = inlined_call_operand.vmem [shape: f32[8,4], index: 10, kind: output, shape index: {}]
  %s11 = sld [smem:[#allocation0]]
  $region58: #{tpu_custom_call.1} parent=0
    _
  %s13 = ssub.s32 1, %s11
  %s14 = scalar_select 0, %s13, %s11
  %v15 = vstv %s5
  %16 = vst [vmem:[#allocation2] sm:$0x1] %v15
  $region1: #{tpu_custom_call.1} parent=0
    #allocation3 [shape = 'u8[8192]{0}', space=vmem, size = 0x2000, scoped, tag = 'input window, operand 1, single buffered']
    #allocation4 [shape = 's32[1]{0}', space=sflag, size = 0x4, scoped, tag = 'scoped memory for tpu_custom_call.1']
    #allocation5 [shape = 'u8[16384]{0}', space=vmem, size = 0x4000, scoped, tag = 'input window, operand 6, single buffered']
    #allocation6 [shape = 's32[1]{0}', space=sflag, size = 0x4, scoped, tag = 'scoped memory for tpu_custom_call.1']
    %17 = vsyncpa [#allocation4], 0
    %18 = vsyncpa [#allocation6], 0
    // Predicated region
    $region2: #{tpu_custom_call.1} parent=1 // pred_check
      _
    $region3: #{tpu_custom_call.1} parent=1 // pred_check_branch
      %20 = sbr.rel (0) target = $region5
    $region4: #{tpu_custom_call.1} parent=1 // pred_region
      _
    $region5: #{tpu_custom_call.1} parent=1 // pred_fallthru
      _
    // Predicated region
    $region6: #{tpu_custom_call.1} parent=1 // pred_check
      _
    $region7: #{tpu_custom_call.1} parent=1 // pred_check_branch
      %22 = sbr.rel (0) target = $region9
    $region8: #{tpu_custom_call.1} parent=1 // pred_region
      %s24 = ssub.s32 256, 256
      %25 = vsyncadd [#allocation4], %s24
      %s26 = sshll.u32 [#allocation3], 4
      %s27 = int_to_ptr.vmem [resolvable:$true] %s26
      %32 = dma.hbm_to_vmem [thread:$0]  %s1, 256, %s27, [#allocation4], 128, 128, 8
    $region9: #{tpu_custom_call.1} parent=1 // pred_fallthru
      _
    // Predicated region
    $region10: #{tpu_custom_call.1} parent=1 // pred_check
      _
    $region11: #{tpu_custom_call.1} parent=1 // pred_check_branch
      %34 = sbr.rel (0) target = $region13
    $region12: #{tpu_custom_call.1} parent=1 // pred_region
      _
    $region13: #{tpu_custom_call.1} parent=1 // pred_fallthru
      _
    // Predicated region
    $region14: #{tpu_custom_call.1} parent=1 // pred_check
      _
    $region15: #{tpu_custom_call.1} parent=1 // pred_check_branch
      %36 = sbr.rel (0) target = $region17
    $region16: #{tpu_custom_call.1} parent=1 // pred_region
      _
    $region17: #{tpu_custom_call.1} parent=1 // pred_fallthru
      _
    // Predicated region
    $region18: #{tpu_custom_call.1} parent=1 // pred_check
      _
    $region19: #{tpu_custom_call.1} parent=1 // pred_check_branch
      %38 = sbr.rel (0) target = $region21
    $region20: #{tpu_custom_call.1} parent=1 // pred_region
      _
    $region21: #{tpu_custom_call.1} parent=1 // pred_fallthru
      _
    // Predicated region
    $region22: #{tpu_custom_call.1} parent=1 // pred_check
      _
    $region23: #{tpu_custom_call.1} parent=1 // pred_check_branch
      %40 = sbr.rel (0) target = $region25
    $region24: #{tpu_custom_call.1} parent=1 // pred_region
      _
    $region25: #{tpu_custom_call.1} parent=1 // pred_fallthru
      _
    // Predicated region
    $region26: #{tpu_custom_call.1} parent=1 // pred_check
      _
    $region27: #{tpu_custom_call.1} parent=1 // pred_check_branch
      %42 = sbr.rel (0) target = $region29
    $region28: #{tpu_custom_call.1} parent=1 // pred_region
      %s44 = ssub.s32 512, 512
      %45 = vsyncadd [#allocation6], %s44
      %s46 = sshll.u32 [#allocation5], 4
      %s47 = int_to_ptr.vmem [resolvable:$true] %s46
      %52 = dma.hbm_to_vmem [thread:$0]  %s6, 512, %s47, [#allocation6], 128, 128, 8
    $region29: #{tpu_custom_call.1} parent=1 // pred_fallthru
      _
    // Predicated region
    $region30: #{tpu_custom_call.1} parent=1 // pred_check
      _
    $region31: #{tpu_custom_call.1} parent=1 // pred_check_branch
      %54 = sbr.rel (0) target = $region33
    $region32: #{tpu_custom_call.1} parent=1 // pred_region
      _
    $region33: #{tpu_custom_call.1} parent=1 // pred_fallthru
      _
    // Predicated region
    $region34: #{tpu_custom_call.1} parent=1 // pred_check
      _
    $region35: #{tpu_custom_call.1} parent=1 // pred_check_branch
      %56 = sbr.rel (0) target = $region37
    $region36: #{tpu_custom_call.1} parent=1 // pred_region
      _
    $region37: #{tpu_custom_call.1} parent=1 // pred_fallthru
      _
    // Predicated region
    $region38: #{tpu_custom_call.1} parent=1 // pred_check
      _
    $region39: #{tpu_custom_call.1} parent=1 // pred_check_branch
      %58 = sbr.rel (0) target = $region41
    $region40: #{tpu_custom_call.1} parent=1 // pred_region
      _
    $region41: #{tpu_custom_call.1} parent=1 // pred_fallthru
      _
    // Predicated region
    $region42: #{tpu_custom_call.1} parent=1 // pred_check
      _
    $region43: #{tpu_custom_call.1} parent=1 // pred_check_branch
      %60 = sbr.rel (0) target = $region45
    $region44: #{tpu_custom_call.1} parent=1 // pred_region
      %61 = dma.done [#allocation4], 256
    $region45: #{tpu_custom_call.1} parent=1 // pred_fallthru
      _
    // Predicated region
    $region46: #{tpu_custom_call.1} parent=1 // pred_check
      _
    $region47: #{tpu_custom_call.1} parent=1 // pred_check_branch
      %63 = sbr.rel (0) target = $region49
    $region48: #{tpu_custom_call.1} parent=1 // pred_region
      %64 = dma.done [#allocation6], 512
    $region49: #{tpu_custom_call.1} parent=1 // pred_fallthru
      _
    %v65 = vld [vmem:[%s0] sm:$0x3]
    %v66 = vld [vmem:[%s0 + $0x2] sm:$0x3]
    %v67 = vld [vmem:[%s0 + $0x4] sm:$0x3]
    %v68 = vld [vmem:[%s0 + $0x6] sm:$0x3]
    %v69 = vld [vmem:[%s0 + $0x8] sm:$0x3]
    %v70 = vld [vmem:[%s0 + $0xa] sm:$0x3]
    %v71 = vld [vmem:[%s0 + $0xc] sm:$0x3]
    %v72 = vld [vmem:[%s0 + $0xe] sm:$0x3]
    %v73 = vld [vmem:[#allocation3] sm:$0xff]
    %v74 = vld [vmem:[#allocation3 + $0x8] sm:$0xff]
    %v75 = vld [vmem:[%s2] sm:$0x1]
    %v77 = vlaneseq
    %v78 = vshrl.u32 %v77, 7
    %v79 = vsub.s32 0, %v78
    %v80 = vrot.slane %v75, %v79
    %v90 = vcombine.low %v65, %v66
    %v91 = vcombine.low %v67, %v68
    %v93 = vunpack.c.l.s4 1983009808
    %v94 = vunpack.c.0.s8 %v93
    %v95 = vlaneseq
    %v96 = vshrl.u32 %v95, 7
    %v97 = vsub.s32 %v94, %v96
    %v98 = vrot.slane %v90, %v97
    %v100 = vunpack.c.l.s4 1983009808
    %v101 = vunpack.c.0.s8 %v100
    %v102 = vlaneseq
    %v103 = vshrl.u32 %v102, 7
    %v104 = vsub.s32 %v101, %v103
    %v105 = vrot.slane %v91, %v104
    %v106 = vcombine.low %v98, %v105
    %v107 = vcombine.low %v69, %v70
    %v108 = vcombine.low %v71, %v72
    %v110 = vunpack.c.l.s4 1983009808
    %v111 = vunpack.c.0.s8 %v110
    %v112 = vlaneseq
    %v113 = vshrl.u32 %v112, 7
    %v114 = vsub.s32 %v111, %v113
    %v115 = vrot.slane %v107, %v114
    %v117 = vunpack.c.l.s4 1983009808
    %v118 = vunpack.c.0.s8 %v117
    %v119 = vlaneseq
    %v120 = vshrl.u32 %v119, 7
    %v121 = vsub.s32 %v118, %v120
    %v122 = vrot.slane %v108, %v121
    %v123 = vcombine.low %v115, %v122
    %vm124 = vcmask 130048
    %v125 = vsel %vm124, %v106, 0
    %v127 = vsel %vm124, %v123, 0
    %129 = vmatprep.subr.mxu0 0.0
    %130 = vmatpush1.msra.mxu0 %v73
    %131 = vmatprep.subr.mxu0 0.0
    %132 = vmatpush1.msra.mxu0 %v74
    %133 = vmatprep.subr.mxu0 0.0
    %134 = vmatpush1.msra.mxu0 0.0
    %135 = vmatprep.subr.mxu0 0.0
    %136 = vmatpush1.msra.mxu0 0.0
    %137 = vmatprep.subr.mxu0 0.0
    %138 = vmatpush1.msra.mxu0 0.0
    %139 = vmatprep.subr.mxu0 0.0
    %140 = vmatpush1.msra.mxu0 0.0
    %141 = vmatprep.subr.mxu0 0.0
    %142 = vmatpush1.msra.mxu0 0.0
    %143 = vmatprep.subr.mxu0 0.0
    %144 = vmatpush1.msra.mxu0 0.0
    %145 = vmatprep.subr.mxu0 0.0
    %146 = vmatpush1.msra.mxu0 0.0
    %147 = vmatprep.subr.mxu0 0.0
    %148 = vmatpush1.msra.mxu0 0.0
    %149 = vmatprep.subr.mxu0 0.0
    %150 = vmatpush1.msra.mxu0 0.0
    %151 = vmatprep.subr.mxu0 0.0
    %152 = vmatpush1.msra.mxu0 0.0
    %153 = vmatprep.subr.mxu0 0.0
    %154 = vmatpush1.msra.mxu0 0.0
    %155 = vmatprep.subr.mxu0 0.0
    %156 = vmatpush1.msra.mxu0 0.0
    %157 = vmatprep.subr.mxu0 0.0
    %158 = vmatpush1.msra.mxu0 0.0
    %159 = vmatprep.subr.mxu0 0.0
    %160 = vmatpush1.msra.mxu0 0.0
    %161 = vmatprep.subr.mxu0 0.0
    %162 = vmatpush1.msra.mxu0 0.0
    %163 = vmatprep.subr.mxu0 0.0
    %164 = vmatpush1.msra.mxu0 0.0
    %165 = vmatprep.subr.mxu0 0.0
    %166 = vmatpush1.msra.mxu0 0.0
    %167 = vmatprep.subr.mxu0 0.0
    %168 = vmatpush1.msra.mxu0 0.0
    %169 = vmatprep.subr.mxu0 0.0
    %170 = vmatpush1.msra.mxu0 0.0
    %171 = vmatprep.subr.mxu0 0.0
    %172 = vmatpush1.msra.mxu0 0.0
    %173 = vmatprep.subr.mxu0 0.0
    %174 = vmatpush1.msra.mxu0 0.0
    %175 = vmatprep.subr.mxu0 0.0
    %176 = vmatpush1.msra.mxu0 0.0
    %177 = vmatprep.subr.mxu0 0.0
    %178 = vmatpush1.msra.mxu0 0.0
    %179 = vmatprep.subr.mxu0 0.0
    %180 = vmatpush1.msra.mxu0 0.0
    %181 = vmatprep.subr.mxu0 0.0
    %182 = vmatpush1.msra.mxu0 0.0
    %183 = vmatprep.subr.mxu0 0.0
    %184 = vmatpush1.msra.mxu0 0.0
    %185 = vmatprep.subr.mxu0 0.0
    %186 = vmatpush1.msra.mxu0 0.0
    %187 = vmatprep.subr.mxu0 0.0
    %188 = vmatpush1.msra.mxu0 0.0
    %189 = vmatprep.subr.mxu0 0.0
    %190 = vmatpush1.msra.mxu0 0.0
    %191 = vmatprep.subr.mxu0 0.0
    %192 = vmatpush1.msra.mxu0 0.0
    %193 = vmatprep.mubr.f32.mxu0 0.0
    %194 = vmatmul.mubr.f32.gmra.mrb[0].mxu0 %v125
    %v195 = vpop.f32.mrb[0].mxu0
    %v196 = vadd.f32 %v80, %v195
    %v197 = vpop.f32.mrb[0].mxu0
    %198 = vmatprep.mubr.f32.mxu0 0.0
    %199 = vmatmul.mubr.f32.gmra.mrb[0].mxu0 %v127
    %v200 = vpop.f32.mrb[0].mxu0
    %v201 = vadd.f32 %v80, %v200
    %v202 = vpop.f32.mrb[0].mxu0
    %203 = vdwg.mxu0
    %v206 = vcombine.high %v196, %v196
    %v208 = vunpack.c.l.s4 1983009808
    %v209 = vunpack.c.0.s8 %v208
    %v210 = vlaneseq
    %v211 = vshrl.u32 %v210, 7
    %v212 = vsub.s32 %v209, %v211
    %v213 = vrot.slane %v196, %v212
    %v215 = vunpack.c.l.s4 1983009808
    %v216 = vunpack.c.0.s8 %v215
    %v217 = vlaneseq
    %v218 = vshrl.u32 %v217, 7
    %v219 = vsub.s32 %v216, %v218
    %v220 = vrot.slane %v206, %v219
    %v221 = vcombine.high %v213, %v213
    %v222 = vcombine.high %v220, %v220
    %v223 = vcombine.high %v201, %v201
    %v225 = vunpack.c.l.s4 1983009808
    %v226 = vunpack.c.0.s8 %v225
    %v227 = vlaneseq
    %v228 = vshrl.u32 %v227, 7
    %v229 = vsub.s32 %v226, %v228
    %v230 = vrot.slane %v201, %v229
    %v232 = vunpack.c.l.s4 1983009808
    %v233 = vunpack.c.0.s8 %v232
    %v234 = vlaneseq
    %v235 = vshrl.u32 %v234, 7
    %v236 = vsub.s32 %v233, %v235
    %v237 = vrot.slane %v223, %v236
    %v238 = vcombine.high %v230, %v230
    %v239 = vcombine.high %v237, %v237
    %v248 = vld [vmem:[%s3] sm:$0xff]
    %v249 = vld [vmem:[%s3 + $0x8] sm:$0xff]
    %v250 = vld [vmem:[%s3 + $0x10] sm:$0xff]
    %v251 = vld [vmem:[%s3 + $0x18] sm:$0xff]
    %vm252 = vcmask 261120
    %v254 = vsel %vm252, 0.0, 0
    %256 = vmatprep.subr.mxu0 0.0
    %257 = vmatpush1.msra.mxu0 %v248
    %258 = vmatprep.subr.mxu0 0.0
    %259 = vmatpush1.msra.mxu0 %v249
    %260 = vmatprep.subr.mxu0 0.0
    %261 = vmatpush1.msra.mxu0 %v250
    %262 = vmatprep.subr.mxu0 0.0
    %263 = vmatpush1.msra.mxu0 %v251
    %264 = vmatprep.subr.mxu0 0.0
    %265 = vmatpush1.msra.mxu0 0.0
    %266 = vmatprep.subr.mxu0 0.0
    %267 = vmatpush1.msra.mxu0 0.0
    %268 = vmatprep.subr.mxu0 0.0
    %269 = vmatpush1.msra.mxu0 0.0
    %270 = vmatprep.subr.mxu0 0.0
    %271 = vmatpush1.msra.mxu0 0.0
    %272 = vmatprep.subr.mxu0 0.0
    %273 = vmatpush1.msra.mxu0 0.0
    %274 = vmatprep.subr.mxu0 0.0
    %275 = vmatpush1.msra.mxu0 0.0
    %276 = vmatprep.subr.mxu0 0.0
    %277 = vmatpush1.msra.mxu0 0.0
    %278 = vmatprep.subr.mxu0 0.0
    %279 = vmatpush1.msra.mxu0 0.0
    %280 = vmatprep.subr.mxu0 0.0
    %281 = vmatpush1.msra.mxu0 0.0
    %282 = vmatprep.subr.mxu0 0.0
    %283 = vmatpush1.msra.mxu0 0.0
    %284 = vmatprep.subr.mxu0 0.0
    %285 = vmatpush1.msra.mxu0 0.0
    %286 = vmatprep.subr.mxu0 0.0
    %287 = vmatpush1.msra.mxu0 0.0
    %288 = vmatprep.subr.mxu0 0.0
    %289 = vmatpush1.msra.mxu0 0.0
    %290 = vmatprep.subr.mxu0 0.0
    %291 = vmatpush1.msra.mxu0 0.0
    %292 = vmatprep.subr.mxu0 0.0
    %293 = vmatpush1.msra.mxu0 0.0
    %294 = vmatprep.subr.mxu0 0.0
    %295 = vmatpush1.msra.mxu0 0.0
    %296 = vmatprep.subr.mxu0 0.0
    %297 = vmatpush1.msra.mxu0 0.0
    %298 = vmatprep.subr.mxu0 0.0
    %299 = vmatpush1.msra.mxu0 0.0
    %300 = vmatprep.subr.mxu0 0.0
    %301 = vmatpush1.msra.mxu0 0.0
    %302 = vmatprep.subr.mxu0 0.0
    %303 = vmatpush1.msra.mxu0 0.0
    %304 = vmatprep.subr.mxu0 0.0
    %305 = vmatpush1.msra.mxu0 0.0
    %306 = vmatprep.subr.mxu0 0.0
    %307 = vmatpush1.msra.mxu0 0.0
    %308 = vmatprep.subr.mxu0 0.0
    %309 = vmatpush1.msra.mxu0 0.0
    %310 = vmatprep.subr.mxu0 0.0
    %311 = vmatpush1.msra.mxu0 0.0
    %312 = vmatprep.subr.mxu0 0.0
    %313 = vmatpush1.msra.mxu0 0.0
    %314 = vmatprep.subr.mxu0 0.0
    %315 = vmatpush1.msra.mxu0 0.0
    %316 = vmatprep.subr.mxu0 0.0
    %317 = vmatpush1.msra.mxu0 0.0
    %318 = vmatprep.subr.mxu0 0.0
    %319 = vmatpush1.msra.mxu0 0.0
    %320 = vmatprep.mubr.f32.mxu0 0.0
    %321 = vmatmul.mubr.f32.gmra.mrb[0].mxu0 %v254
    %v322 = vpop.f32.mrb[0].mxu0
    %v323 = vadd.f32 0.0, %v322
    %v324 = vpop.f32.mrb[0].mxu0
    %325 = vdwg.mxu0
    %v326 = vadd.f32 %v213, %v323
    %v327 = vxor.u32 %v326, 2147483648
    %v328 = vmul.f32 %v327, 1.442695
    %v329 = vpow.pop %v328
    %v330 = vadd.f32 %v329, 1.0
    %v331 = vrcp.pop %v330
    %v332 = vmul.f32 1.0, %v331
    %v333 = vtanh.pop %v326
    %v334 = vmul.f32 %v332, 0.0
    %336 = vrot.lane.b32.xlu0 %v333, 64
    %v337 = vpop.permute.xlu0 %336
    %v339 = vmul.f32 %v332, %v337
    %341 = vrot.lane.b32.xlu0 %v339, 32
    %v342 = vpop.permute.xlu0 %341
    %v344 = vadd.f32 %v334, %v342
    %v345 = vtanh.pop %v344
    %347 = vrot.lane.b32.xlu0 %v345, 64
    %v348 = vpop.permute.xlu0 %347
    %v350 = vmul.f32 %v332, %v348
    %v353 = vunpack.c.l.s4 1983009808
    %v354 = vunpack.c.0.s8 %v353
    %v355 = vlaneseq
    %v356 = vshrl.u32 %v355, 7
    %v357 = vsub.s32 %v354, %v356
    %v358 = vrot.slane %v350, %v357
    %359 = vrot.lane.b32.xlu0 %v358, 32
    %v360 = vpop.permute.xlu0 %359
    %v361 = vsel %vm252, %v360, 0
    %363 = vmatprep.subr.mxu0 0.0
    %364 = vmatpush1.msra.mxu0 %v248
    %365 = vmatprep.subr.mxu0 0.0
    %366 = vmatpush1.msra.mxu0 %v249
    %367 = vmatprep.subr.mxu0 0.0
    %368 = vmatpush1.msra.mxu0 %v250
    %369 = vmatprep.subr.mxu0 0.0
    %370 = vmatpush1.msra.mxu0 %v251
    %371 = vmatprep.subr.mxu0 0.0
    %372 = vmatpush1.msra.mxu0 0.0
    %373 = vmatprep.subr.mxu0 0.0
    %374 = vmatpush1.msra.mxu0 0.0
    %375 = vmatprep.subr.mxu0 0.0
    %376 = vmatpush1.msra.mxu0 0.0
    %377 = vmatprep.subr.mxu0 0.0
    %378 = vmatpush1.msra.mxu0 0.0
    %379 = vmatprep.subr.mxu0 0.0
    %380 = vmatpush1.msra.mxu0 0.0
    %381 = vmatprep.subr.mxu0 0.0
    %382 = vmatpush1.msra.mxu0 0.0
    %383 = vmatprep.subr.mxu0 0.0
    %384 = vmatpush1.msra.mxu0 0.0
    %385 = vmatprep.subr.mxu0 0.0
    %386 = vmatpush1.msra.mxu0 0.0
    %387 = vmatprep.subr.mxu0 0.0
    %388 = vmatpush1.msra.mxu0 0.0
    %389 = vmatprep.subr.mxu0 0.0
    %390 = vmatpush1.msra.mxu0 0.0
    %391 = vmatprep.subr.mxu0 0.0
    %392 = vmatpush1.msra.mxu0 0.0
    %393 = vmatprep.subr.mxu0 0.0
    %394 = vmatpush1.msra.mxu0 0.0
    %395 = vmatprep.subr.mxu0 0.0
    %396 = vmatpush1.msra.mxu0 0.0
    %397 = vmatprep.subr.mxu0 0.0
    %398 = vmatpush1.msra.mxu0 0.0
    %399 = vmatprep.subr.mxu0 0.0
    %400 = vmatpush1.msra.mxu0 0.0
    %401 = vmatprep.subr.mxu0 0.0
    %402 = vmatpush1.msra.mxu0 0.0
    %403 = vmatprep.subr.mxu0 0.0
    %404 = vmatpush1.msra.mxu0 0.0
    %405 = vmatprep.subr.mxu0 0.0
    %406 = vmatpush1.msra.mxu0 0.0
    %407 = vmatprep.subr.mxu0 0.0
    %408 = vmatpush1.msra.mxu0 0.0
    %409 = vmatprep.subr.mxu0 0.0
    %410 = vmatpush1.msra.mxu0 0.0
    %411 = vmatprep.subr.mxu0 0.0
    %412 = vmatpush1.msra.mxu0 0.0
    %413 = vmatprep.subr.mxu0 0.0
    %414 = vmatpush1.msra.mxu0 0.0
    %415 = vmatprep.subr.mxu0 0.0
    %416 = vmatpush1.msra.mxu0 0.0
    %417 = vmatprep.subr.mxu0 0.0
    %418 = vmatpush1.msra.mxu0 0.0
    %419 = vmatprep.subr.mxu0 0.0
    %420 = vmatpush1.msra.mxu0 0.0
    %421 = vmatprep.subr.mxu0 0.0
    %422 = vmatpush1.msra.mxu0 0.0
    %423 = vmatprep.subr.mxu0 0.0
    %424 = vmatpush1.msra.mxu0 0.0
    %425 = vmatprep.subr.mxu0 0.0
    %426 = vmatpush1.msra.mxu0 0.0
    %427 = vmatprep.mubr.f32.mxu0 0.0
    %428 = vmatmul.mubr.f32.gmra.mrb[0].mxu0 %v361
    %v429 = vpop.f32.mrb[0].mxu0
    %v430 = vadd.f32 0.0, %v429
    %v431 = vpop.f32.mrb[0].mxu0
    %432 = vdwg.mxu0
    %v433 = vadd.f32 %v221, %v430
    %v434 = vxor.u32 %v433, 2147483648
    %v435 = vmul.f32 %v434, 1.442695
    %v436 = vpow.pop %v435
    %v437 = vadd.f32 %v436, 1.0
    %v438 = vrcp.pop %v437
    %v439 = vmul.f32 1.0, %v438
    %v440 = vtanh.pop %v433
    %v441 = vmul.f32 %v439, %v344
    %443 = vrot.lane.b32.xlu0 %v440, 64
    %v444 = vpop.permute.xlu0 %443
    %v446 = vmul.f32 %v439, %v444
    %448 = vrot.lane.b32.xlu0 %v446, 32
    %v449 = vpop.permute.xlu0 %448
    %v451 = vadd.f32 %v441, %v449
    %v452 = vtanh.pop %v451
    %454 = vrot.lane.b32.xlu0 %v452, 64
    %v455 = vpop.permute.xlu0 %454
    %v457 = vmul.f32 %v439, %v455
    %v460 = vunpack.c.l.s4 1983009808
    %v461 = vunpack.c.0.s8 %v460
    %v462 = vlaneseq
    %v463 = vshrl.u32 %v462, 7
    %v464 = vsub.s32 %v461, %v463
    %v465 = vrot.slane %v457, %v464
    %466 = vrot.lane.b32.xlu0 %v465, 32
    %v467 = vpop.permute.xlu0 %466
    %v468 = vsel %vm252, %v467, 0
    %470 = vmatprep.subr.mxu0 0.0
    %471 = vmatpush1.msra.mxu0 %v248
    %472 = vmatprep.subr.mxu0 0.0
    %473 = vmatpush1.msra.mxu0 %v249
    %474 = vmatprep.subr.mxu0 0.0
    %475 = vmatpush1.msra.mxu0 %v250
    %476 = vmatprep.subr.mxu0 0.0
    %477 = vmatpush1.msra.mxu0 %v251
    %478 = vmatprep.subr.mxu0 0.0
    %479 = vmatpush1.msra.mxu0 0.0
    %480 = vmatprep.subr.mxu0 0.0
    %481 = vmatpush1.msra.mxu0 0.0
    %482 = vmatprep.subr.mxu0 0.0
    %483 = vmatpush1.msra.mxu0 0.0
    %484 = vmatprep.subr.mxu0 0.0
    %485 = vmatpush1.msra.mxu0 0.0
    %486 = vmatprep.subr.mxu0 0.0
    %487 = vmatpush1.msra.mxu0 0.0
    %488 = vmatprep.subr.mxu0 0.0
    %489 = vmatpush1.msra.mxu0 0.0
    %490 = vmatprep.subr.mxu0 0.0
    %491 = vmatpush1.msra.mxu0 0.0
    %492 = vmatprep.subr.mxu0 0.0
    %493 = vmatpush1.msra.mxu0 0.0
    %494 = vmatprep.subr.mxu0 0.0
    %495 = vmatpush1.msra.mxu0 0.0
    %496 = vmatprep.subr.mxu0 0.0
    %497 = vmatpush1.msra.mxu0 0.0
    %498 = vmatprep.subr.mxu0 0.0
    %499 = vmatpush1.msra.mxu0 0.0
    %500 = vmatprep.subr.mxu0 0.0
    %501 = vmatpush1.msra.mxu0 0.0
    %502 = vmatprep.subr.mxu0 0.0
    %503 = vmatpush1.msra.mxu0 0.0
    %504 = vmatprep.subr.mxu0 0.0
    %505 = vmatpush1.msra.mxu0 0.0
    %506 = vmatprep.subr.mxu0 0.0
    %507 = vmatpush1.msra.mxu0 0.0
    %508 = vmatprep.subr.mxu0 0.0
    %509 = vmatpush1.msra.mxu0 0.0
    %510 = vmatprep.subr.mxu0 0.0
    %511 = vmatpush1.msra.mxu0 0.0
    %512 = vmatprep.subr.mxu0 0.0
    %513 = vmatpush1.msra.mxu0 0.0
    %514 = vmatprep.subr.mxu0 0.0
    %515 = vmatpush1.msra.mxu0 0.0
    %516 = vmatprep.subr.mxu0 0.0
    %517 = vmatpush1.msra.mxu0 0.0
    %518 = vmatprep.subr.mxu0 0.0
    %519 = vmatpush1.msra.mxu0 0.0
    %520 = vmatprep.subr.mxu0 0.0
    %521 = vmatpush1.msra.mxu0 0.0
    %522 = vmatprep.subr.mxu0 0.0
    %523 = vmatpush1.msra.mxu0 0.0
    %524 = vmatprep.subr.mxu0 0.0
    %525 = vmatpush1.msra.mxu0 0.0
    %526 = vmatprep.subr.mxu0 0.0
    %527 = vmatpush1.msra.mxu0 0.0
    %528 = vmatprep.subr.mxu0 0.0
    %529 = vmatpush1.msra.mxu0 0.0
    %530 = vmatprep.subr.mxu0 0.0
    %531 = vmatpush1.msra.mxu0 0.0
    %532 = vmatprep.subr.mxu0 0.0
    %533 = vmatpush1.msra.mxu0 0.0
    %534 = vmatprep.mubr.f32.mxu0 0.0
    %535 = vmatmul.mubr.f32.gmra.mrb[0].mxu0 %v468
    %v536 = vpop.f32.mrb[0].mxu0
    %v537 = vadd.f32 0.0, %v536
    %v538 = vpop.f32.mrb[0].mxu0
    %539 = vdwg.mxu0
    %v540 = vadd.f32 %v220, %v537
    %v541 = vxor.u32 %v540, 2147483648
    %v542 = vmul.f32 %v541, 1.442695
    %v543 = vpow.pop %v542
    %v544 = vadd.f32 %v543, 1.0
    %v545 = vrcp.pop %v544
    %v546 = vmul.f32 1.0, %v545
    %v547 = vtanh.pop %v540
    %v548 = vmul.f32 %v546, %v451
    %550 = vrot.lane.b32.xlu0 %v547, 64
    %v551 = vpop.permute.xlu0 %550
    %v553 = vmul.f32 %v546, %v551
    %555 = vrot.lane.b32.xlu0 %v553, 32
    %v556 = vpop.permute.xlu0 %555
    %v558 = vadd.f32 %v548, %v556
    %v559 = vtanh.pop %v558
    %561 = vrot.lane.b32.xlu0 %v559, 64
    %v562 = vpop.permute.xlu0 %561
    %v564 = vmul.f32 %v546, %v562
    %v567 = vunpack.c.l.s4 1983009808
    %v568 = vunpack.c.0.s8 %v567
    %v569 = vlaneseq
    %v570 = vshrl.u32 %v569, 7
    %v571 = vsub.s32 %v568, %v570
    %v572 = vrot.slane %v564, %v571
    %573 = vrot.lane.b32.xlu0 %v572, 32
    %v574 = vpop.permute.xlu0 %573
    %v575 = vsel %vm252, %v574, 0
    %577 = vmatprep.subr.mxu0 0.0
    %578 = vmatpush1.msra.mxu0 %v248
    %579 = vmatprep.subr.mxu0 0.0
    %580 = vmatpush1.msra.mxu0 %v249
    %581 = vmatprep.subr.mxu0 0.0
    %582 = vmatpush1.msra.mxu0 %v250
    %583 = vmatprep.subr.mxu0 0.0
    %584 = vmatpush1.msra.mxu0 %v251
    %585 = vmatprep.subr.mxu0 0.0
    %586 = vmatpush1.msra.mxu0 0.0
    %587 = vmatprep.subr.mxu0 0.0
    %588 = vmatpush1.msra.mxu0 0.0
    %589 = vmatprep.subr.mxu0 0.0
    %590 = vmatpush1.msra.mxu0 0.0
    %591 = vmatprep.subr.mxu0 0.0
    %592 = vmatpush1.msra.mxu0 0.0
    %593 = vmatprep.subr.mxu0 0.0
    %594 = vmatpush1.msra.mxu0 0.0
    %595 = vmatprep.subr.mxu0 0.0
    %596 = vmatpush1.msra.mxu0 0.0
    %597 = vmatprep.subr.mxu0 0.0
    %598 = vmatpush1.msra.mxu0 0.0
    %599 = vmatprep.subr.mxu0 0.0
    %600 = vmatpush1.msra.mxu0 0.0
    %601 = vmatprep.subr.mxu0 0.0
    %602 = vmatpush1.msra.mxu0 0.0
    %603 = vmatprep.subr.mxu0 0.0
    %604 = vmatpush1.msra.mxu0 0.0
    %605 = vmatprep.subr.mxu0 0.0
    %606 = vmatpush1.msra.mxu0 0.0
    %607 = vmatprep.subr.mxu0 0.0
    %608 = vmatpush1.msra.mxu0 0.0
    %609 = vmatprep.subr.mxu0 0.0
    %610 = vmatpush1.msra.mxu0 0.0
    %611 = vmatprep.subr.mxu0 0.0
    %612 = vmatpush1.msra.mxu0 0.0
    %613 = vmatprep.subr.mxu0 0.0
    %614 = vmatpush1.msra.mxu0 0.0
    %615 = vmatprep.subr.mxu0 0.0
    %616 = vmatpush1.msra.mxu0 0.0
    %617 = vmatprep.subr.mxu0 0.0
    %618 = vmatpush1.msra.mxu0 0.0
    %619 = vmatprep.subr.mxu0 0.0
    %620 = vmatpush1.msra.mxu0 0.0
    %621 = vmatprep.subr.mxu0 0.0
    %622 = vmatpush1.msra.mxu0 0.0
    %623 = vmatprep.subr.mxu0 0.0
    %624 = vmatpush1.msra.mxu0 0.0
    %625 = vmatprep.subr.mxu0 0.0
    %626 = vmatpush1.msra.mxu0 0.0
    %627 = vmatprep.subr.mxu0 0.0
    %628 = vmatpush1.msra.mxu0 0.0
    %629 = vmatprep.subr.mxu0 0.0
    %630 = vmatpush1.msra.mxu0 0.0
    %631 = vmatprep.subr.mxu0 0.0
    %632 = vmatpush1.msra.mxu0 0.0
    %633 = vmatprep.subr.mxu0 0.0
    %634 = vmatpush1.msra.mxu0 0.0
    %635 = vmatprep.subr.mxu0 0.0
    %636 = vmatpush1.msra.mxu0 0.0
    %637 = vmatprep.subr.mxu0 0.0
    %638 = vmatpush1.msra.mxu0 0.0
    %639 = vmatprep.subr.mxu0 0.0
    %640 = vmatpush1.msra.mxu0 0.0
    %641 = vmatprep.mubr.f32.mxu0 0.0
    %642 = vmatmul.mubr.f32.gmra.mrb[0].mxu0 %v575
    %v643 = vpop.f32.mrb[0].mxu0
    %v644 = vadd.f32 0.0, %v643
    %v645 = vpop.f32.mrb[0].mxu0
    %646 = vdwg.mxu0
    %v647 = vadd.f32 %v222, %v644
    %v648 = vxor.u32 %v647, 2147483648
    %v649 = vmul.f32 %v648, 1.442695
    %v650 = vpow.pop %v649
    %v651 = vadd.f32 %v650, 1.0
    %v652 = vrcp.pop %v651
    %v653 = vmul.f32 1.0, %v652
    %v654 = vtanh.pop %v647
    %v655 = vmul.f32 %v653, %v558
    %657 = vrot.lane.b32.xlu0 %v654, 64
    %v658 = vpop.permute.xlu0 %657
    %v660 = vmul.f32 %v653, %v658
    %662 = vrot.lane.b32.xlu0 %v660, 32
    %v663 = vpop.permute.xlu0 %662
    %v665 = vadd.f32 %v655, %v663
    %v666 = vtanh.pop %v665
    %668 = vrot.lane.b32.xlu0 %v666, 64
    %v669 = vpop.permute.xlu0 %668
    %v671 = vmul.f32 %v653, %v669
    %v674 = vunpack.c.l.s4 1983009808
    %v675 = vunpack.c.0.s8 %v674
    %v676 = vlaneseq
    %v677 = vshrl.u32 %v676, 7
    %v678 = vsub.s32 %v675, %v677
    %v679 = vrot.slane %v671, %v678
    %680 = vrot.lane.b32.xlu0 %v679, 32
    %v681 = vpop.permute.xlu0 %680
    %v682 = vsel %vm252, %v681, 0
    %684 = vmatprep.subr.mxu0 0.0
    %685 = vmatpush1.msra.mxu0 %v248
    %686 = vmatprep.subr.mxu0 0.0
    %687 = vmatpush1.msra.mxu0 %v249
    %688 = vmatprep.subr.mxu0 0.0
    %689 = vmatpush1.msra.mxu0 %v250
    %690 = vmatprep.subr.mxu0 0.0
    %691 = vmatpush1.msra.mxu0 %v251
    %692 = vmatprep.subr.mxu0 0.0
    %693 = vmatpush1.msra.mxu0 0.0
    %694 = vmatprep.subr.mxu0 0.0
    %695 = vmatpush1.msra.mxu0 0.0
    %696 = vmatprep.subr.mxu0 0.0
    %697 = vmatpush1.msra.mxu0 0.0
    %698 = vmatprep.subr.mxu0 0.0
    %699 = vmatpush1.msra.mxu0 0.0
    %700 = vmatprep.subr.mxu0 0.0
    %701 = vmatpush1.msra.mxu0 0.0
    %702 = vmatprep.subr.mxu0 0.0
    %703 = vmatpush1.msra.mxu0 0.0
    %704 = vmatprep.subr.mxu0 0.0
    %705 = vmatpush1.msra.mxu0 0.0
    %706 = vmatprep.subr.mxu0 0.0
    %707 = vmatpush1.msra.mxu0 0.0
    %708 = vmatprep.subr.mxu0 0.0
    %709 = vmatpush1.msra.mxu0 0.0
    %710 = vmatprep.subr.mxu0 0.0
    %711 = vmatpush1.msra.mxu0 0.0
    %712 = vmatprep.subr.mxu0 0.0
    %713 = vmatpush1.msra.mxu0 0.0
    %714 = vmatprep.subr.mxu0 0.0
    %715 = vmatpush1.msra.mxu0 0.0
    %716 = vmatprep.subr.mxu0 0.0
    %717 = vmatpush1.msra.mxu0 0.0
    %718 = vmatprep.subr.mxu0 0.0
    %719 = vmatpush1.msra.mxu0 0.0
    %720 = vmatprep.subr.mxu0 0.0
    %721 = vmatpush1.msra.mxu0 0.0
    %722 = vmatprep.subr.mxu0 0.0
    %723 = vmatpush1.msra.mxu0 0.0
    %724 = vmatprep.subr.mxu0 0.0
    %725 = vmatpush1.msra.mxu0 0.0
    %726 = vmatprep.subr.mxu0 0.0
    %727 = vmatpush1.msra.mxu0 0.0
    %728 = vmatprep.subr.mxu0 0.0
    %729 = vmatpush1.msra.mxu0 0.0
    %730 = vmatprep.subr.mxu0 0.0
    %731 = vmatpush1.msra.mxu0 0.0
    %732 = vmatprep.subr.mxu0 0.0
    %733 = vmatpush1.msra.mxu0 0.0
    %734 = vmatprep.subr.mxu0 0.0
    %735 = vmatpush1.msra.mxu0 0.0
    %736 = vmatprep.subr.mxu0 0.0
    %737 = vmatpush1.msra.mxu0 0.0
    %738 = vmatprep.subr.mxu0 0.0
    %739 = vmatpush1.msra.mxu0 0.0
    %740 = vmatprep.subr.mxu0 0.0
    %741 = vmatpush1.msra.mxu0 0.0
    %742 = vmatprep.subr.mxu0 0.0
    %743 = vmatpush1.msra.mxu0 0.0
    %744 = vmatprep.subr.mxu0 0.0
    %745 = vmatpush1.msra.mxu0 0.0
    %746 = vmatprep.subr.mxu0 0.0
    %747 = vmatpush1.msra.mxu0 0.0
    %748 = vmatprep.mubr.f32.mxu0 0.0
    %749 = vmatmul.mubr.f32.gmra.mrb[0].mxu0 %v682
    %v750 = vpop.f32.mrb[0].mxu0
    %v751 = vadd.f32 0.0, %v750
    %v752 = vpop.f32.mrb[0].mxu0
    %753 = vdwg.mxu0
    %v754 = vadd.f32 %v230, %v751
    %v755 = vxor.u32 %v754, 2147483648
    %v756 = vmul.f32 %v755, 1.442695
    %v757 = vpow.pop %v756
    %v758 = vadd.f32 %v757, 1.0
    %v759 = vrcp.pop %v758
    %v760 = vmul.f32 1.0, %v759
    %v761 = vtanh.pop %v754
    %v762 = vmul.f32 %v760, %v665
    %764 = vrot.lane.b32.xlu0 %v761, 64
    %v765 = vpop.permute.xlu0 %764
    %v767 = vmul.f32 %v760, %v765
    %769 = vrot.lane.b32.xlu0 %v767, 32
    %v770 = vpop.permute.xlu0 %769
    %v772 = vadd.f32 %v762, %v770
    %v773 = vtanh.pop %v772
    %775 = vrot.lane.b32.xlu0 %v773, 64
    %v776 = vpop.permute.xlu0 %775
    %v778 = vmul.f32 %v760, %v776
    %v781 = vunpack.c.l.s4 1983009808
    %v782 = vunpack.c.0.s8 %v781
    %v783 = vlaneseq
    %v784 = vshrl.u32 %v783, 7
    %v785 = vsub.s32 %v782, %v784
    %v786 = vrot.slane %v778, %v785
    %787 = vrot.lane.b32.xlu0 %v786, 32
    %v788 = vpop.permute.xlu0 %787
    %v789 = vsel %vm252, %v788, 0
    %791 = vmatprep.subr.mxu0 0.0
    %792 = vmatpush1.msra.mxu0 %v248
    %793 = vmatprep.subr.mxu0 0.0
    %794 = vmatpush1.msra.mxu0 %v249
    %795 = vmatprep.subr.mxu0 0.0
    %796 = vmatpush1.msra.mxu0 %v250
    %797 = vmatprep.subr.mxu0 0.0
    %798 = vmatpush1.msra.mxu0 %v251
    %799 = vmatprep.subr.mxu0 0.0
    %800 = vmatpush1.msra.mxu0 0.0
    %801 = vmatprep.subr.mxu0 0.0
    %802 = vmatpush1.msra.mxu0 0.0
    %803 = vmatprep.subr.mxu0 0.0
    %804 = vmatpush1.msra.mxu0 0.0
    %805 = vmatprep.subr.mxu0 0.0
    %806 = vmatpush1.msra.mxu0 0.0
    %807 = vmatprep.subr.mxu0 0.0
    %808 = vmatpush1.msra.mxu0 0.0
    %809 = vmatprep.subr.mxu0 0.0
    %810 = vmatpush1.msra.mxu0 0.0
    %811 = vmatprep.subr.mxu0 0.0
    %812 = vmatpush1.msra.mxu0 0.0
    %813 = vmatprep.subr.mxu0 0.0
    %814 = vmatpush1.msra.mxu0 0.0
    %815 = vmatprep.subr.mxu0 0.0
    %816 = vmatpush1.msra.mxu0 0.0
    %817 = vmatprep.subr.mxu0 0.0
    %818 = vmatpush1.msra.mxu0 0.0
    %819 = vmatprep.subr.mxu0 0.0
    %820 = vmatpush1.msra.mxu0 0.0
    %821 = vmatprep.subr.mxu0 0.0
    %822 = vmatpush1.msra.mxu0 0.0
    %823 = vmatprep.subr.mxu0 0.0
    %824 = vmatpush1.msra.mxu0 0.0
    %825 = vmatprep.subr.mxu0 0.0
    %826 = vmatpush1.msra.mxu0 0.0
    %827 = vmatprep.subr.mxu0 0.0
    %828 = vmatpush1.msra.mxu0 0.0
    %829 = vmatprep.subr.mxu0 0.0
    %830 = vmatpush1.msra.mxu0 0.0
    %831 = vmatprep.subr.mxu0 0.0
    %832 = vmatpush1.msra.mxu0 0.0
    %833 = vmatprep.subr.mxu0 0.0
    %834 = vmatpush1.msra.mxu0 0.0
    %835 = vmatprep.subr.mxu0 0.0
    %836 = vmatpush1.msra.mxu0 0.0
    %837 = vmatprep.subr.mxu0 0.0
    %838 = vmatpush1.msra.mxu0 0.0
    %839 = vmatprep.subr.mxu0 0.0
    %840 = vmatpush1.msra.mxu0 0.0
    %841 = vmatprep.subr.mxu0 0.0
    %842 = vmatpush1.msra.mxu0 0.0
    %843 = vmatprep.subr.mxu0 0.0
    %844 = vmatpush1.msra.mxu0 0.0
    %845 = vmatprep.subr.mxu0 0.0
    %846 = vmatpush1.msra.mxu0 0.0
    %847 = vmatprep.subr.mxu0 0.0
    %848 = vmatpush1.msra.mxu0 0.0
    %849 = vmatprep.subr.mxu0 0.0
    %850 = vmatpush1.msra.mxu0 0.0
    %851 = vmatprep.subr.mxu0 0.0
    %852 = vmatpush1.msra.mxu0 0.0
    %853 = vmatprep.subr.mxu0 0.0
    %854 = vmatpush1.msra.mxu0 0.0
    %855 = vmatprep.mubr.f32.mxu0 0.0
    %856 = vmatmul.mubr.f32.gmra.mrb[0].mxu0 %v789
    %v857 = vpop.f32.mrb[0].mxu0
    %v858 = vadd.f32 0.0, %v857
    %v859 = vpop.f32.mrb[0].mxu0
    %860 = vdwg.mxu0
    %v861 = vadd.f32 %v238, %v858
    %v862 = vxor.u32 %v861, 2147483648
    %v863 = vmul.f32 %v862, 1.442695
    %v864 = vpow.pop %v863
    %v865 = vadd.f32 %v864, 1.0
    %v866 = vrcp.pop %v865
    %v867 = vmul.f32 1.0, %v866
    %v868 = vtanh.pop %v861
    %v869 = vmul.f32 %v867, %v772
    %871 = vrot.lane.b32.xlu0 %v868, 64
    %v872 = vpop.permute.xlu0 %871
    %v874 = vmul.f32 %v867, %v872
    %876 = vrot.lane.b32.xlu0 %v874, 32
    %v877 = vpop.permute.xlu0 %876
    %v879 = vadd.f32 %v869, %v877
    %v880 = vtanh.pop %v879
    %882 = vrot.lane.b32.xlu0 %v880, 64
    %v883 = vpop.permute.xlu0 %882
    %v885 = vmul.f32 %v867, %v883
    %v888 = vunpack.c.l.s4 1983009808
    %v889 = vunpack.c.0.s8 %v888
    %v890 = vlaneseq
    %v891 = vshrl.u32 %v890, 7
    %v892 = vsub.s32 %v889, %v891
    %v893 = vrot.slane %v885, %v892
    %894 = vrot.lane.b32.xlu0 %v893, 32
    %v895 = vpop.permute.xlu0 %894
    %v896 = vsel %vm252, %v895, 0
    %898 = vmatprep.subr.mxu0 0.0
    %899 = vmatpush1.msra.mxu0 %v248
    %900 = vmatprep.subr.mxu0 0.0
    %901 = vmatpush1.msra.mxu0 %v249
    %902 = vmatprep.subr.mxu0 0.0
    %903 = vmatpush1.msra.mxu0 %v250
    %904 = vmatprep.subr.mxu0 0.0
    %905 = vmatpush1.msra.mxu0 %v251
    %906 = vmatprep.subr.mxu0 0.0
    %907 = vmatpush1.msra.mxu0 0.0
    %908 = vmatprep.subr.mxu0 0.0
    %909 = vmatpush1.msra.mxu0 0.0
    %910 = vmatprep.subr.mxu0 0.0
    %911 = vmatpush1.msra.mxu0 0.0
    %912 = vmatprep.subr.mxu0 0.0
    %913 = vmatpush1.msra.mxu0 0.0
    %914 = vmatprep.subr.mxu0 0.0
    %915 = vmatpush1.msra.mxu0 0.0
    %916 = vmatprep.subr.mxu0 0.0
    %917 = vmatpush1.msra.mxu0 0.0
    %918 = vmatprep.subr.mxu0 0.0
    %919 = vmatpush1.msra.mxu0 0.0
    %920 = vmatprep.subr.mxu0 0.0
    %921 = vmatpush1.msra.mxu0 0.0
    %922 = vmatprep.subr.mxu0 0.0
    %923 = vmatpush1.msra.mxu0 0.0
    %924 = vmatprep.subr.mxu0 0.0
    %925 = vmatpush1.msra.mxu0 0.0
    %926 = vmatprep.subr.mxu0 0.0
    %927 = vmatpush1.msra.mxu0 0.0
    %928 = vmatprep.subr.mxu0 0.0
    %929 = vmatpush1.msra.mxu0 0.0
    %930 = vmatprep.subr.mxu0 0.0
    %931 = vmatpush1.msra.mxu0 0.0
    %932 = vmatprep.subr.mxu0 0.0
    %933 = vmatpush1.msra.mxu0 0.0
    %934 = vmatprep.subr.mxu0 0.0
    %935 = vmatpush1.msra.mxu0 0.0
    %936 = vmatprep.subr.mxu0 0.0
    %937 = vmatpush1.msra.mxu0 0.0
    %938 = vmatprep.subr.mxu0 0.0
    %939 = vmatpush1.msra.mxu0 0.0
    %940 = vmatprep.subr.mxu0 0.0
    %941 = vmatpush1.msra.mxu0 0.0
    %942 = vmatprep.subr.mxu0 0.0
    %943 = vmatpush1.msra.mxu0 0.0
    %944 = vmatprep.subr.mxu0 0.0
    %945 = vmatpush1.msra.mxu0 0.0
    %946 = vmatprep.subr.mxu0 0.0
    %947 = vmatpush1.msra.mxu0 0.0
    %948 = vmatprep.subr.mxu0 0.0
    %949 = vmatpush1.msra.mxu0 0.0
    %950 = vmatprep.subr.mxu0 0.0
    %951 = vmatpush1.msra.mxu0 0.0
    %952 = vmatprep.subr.mxu0 0.0
    %953 = vmatpush1.msra.mxu0 0.0
    %954 = vmatprep.subr.mxu0 0.0
    %955 = vmatpush1.msra.mxu0 0.0
    %956 = vmatprep.subr.mxu0 0.0
    %957 = vmatpush1.msra.mxu0 0.0
    %958 = vmatprep.subr.mxu0 0.0
    %959 = vmatpush1.msra.mxu0 0.0
    %960 = vmatprep.subr.mxu0 0.0
    %961 = vmatpush1.msra.mxu0 0.0
    %962 = vmatprep.mubr.f32.mxu0 0.0
    %963 = vmatmul.mubr.f32.gmra.mrb[0].mxu0 %v896
    %v964 = vpop.f32.mrb[0].mxu0
    %v965 = vadd.f32 0.0, %v964
    %v966 = vpop.f32.mrb[0].mxu0
    %967 = vdwg.mxu0
    %v968 = vadd.f32 %v237, %v965
    %v969 = vxor.u32 %v968, 2147483648
    %v970 = vmul.f32 %v969, 1.442695
    %v971 = vpow.pop %v970
    %v972 = vadd.f32 %v971, 1.0
    %v973 = vrcp.pop %v972
    %v974 = vmul.f32 1.0, %v973
    %v975 = vtanh.pop %v968
    %v976 = vmul.f32 %v974, %v879
    %978 = vrot.lane.b32.xlu0 %v975, 64
    %v979 = vpop.permute.xlu0 %978
    %v981 = vmul.f32 %v974, %v979
    %983 = vrot.lane.b32.xlu0 %v981, 32
    %v984 = vpop.permute.xlu0 %983
    %v986 = vadd.f32 %v976, %v984
    %v987 = vtanh.pop %v986
    %989 = vrot.lane.b32.xlu0 %v987, 64
    %v990 = vpop.permute.xlu0 %989
    %v992 = vmul.f32 %v974, %v990
    %v995 = vunpack.c.l.s4 1983009808
    %v996 = vunpack.c.0.s8 %v995
    %v997 = vlaneseq
    %v998 = vshrl.u32 %v997, 7
    %v999 = vsub.s32 %v996, %v998
    %v1000 = vrot.slane %v992, %v999
    %1001 = vrot.lane.b32.xlu0 %v1000, 32
    %v1002 = vpop.permute.xlu0 %1001
    %v1003 = vsel %vm252, %v1002, 0
    %1005 = vmatprep.subr.mxu0 0.0
    %1006 = vmatpush1.msra.mxu0 %v248
    %1007 = vmatprep.subr.mxu0 0.0
    %1008 = vmatpush1.msra.mxu0 %v249
    %1009 = vmatprep.subr.mxu0 0.0
    %1010 = vmatpush1.msra.mxu0 %v250
    %1011 = vmatprep.subr.mxu0 0.0
    %1012 = vmatpush1.msra.mxu0 %v251
    %1013 = vmatprep.subr.mxu0 0.0
    %1014 = vmatpush1.msra.mxu0 0.0
    %1015 = vmatprep.subr.mxu0 0.0
    %1016 = vmatpush1.msra.mxu0 0.0
    %1017 = vmatprep.subr.mxu0 0.0
    %1018 = vmatpush1.msra.mxu0 0.0
    %1019 = vmatprep.subr.mxu0 0.0
    %1020 = vmatpush1.msra.mxu0 0.0
    %1021 = vmatprep.subr.mxu0 0.0
    %1022 = vmatpush1.msra.mxu0 0.0
    %1023 = vmatprep.subr.mxu0 0.0
    %1024 = vmatpush1.msra.mxu0 0.0
    %1025 = vmatprep.subr.mxu0 0.0
    %1026 = vmatpush1.msra.mxu0 0.0
    %1027 = vmatprep.subr.mxu0 0.0
    %1028 = vmatpush1.msra.mxu0 0.0
    %1029 = vmatprep.subr.mxu0 0.0
    %1030 = vmatpush1.msra.mxu0 0.0
    %1031 = vmatprep.subr.mxu0 0.0
    %1032 = vmatpush1.msra.mxu0 0.0
    %1033 = vmatprep.subr.mxu0 0.0
    %1034 = vmatpush1.msra.mxu0 0.0
    %1035 = vmatprep.subr.mxu0 0.0
    %1036 = vmatpush1.msra.mxu0 0.0
    %1037 = vmatprep.subr.mxu0 0.0
    %1038 = vmatpush1.msra.mxu0 0.0
    %1039 = vmatprep.subr.mxu0 0.0
    %1040 = vmatpush1.msra.mxu0 0.0
    %1041 = vmatprep.subr.mxu0 0.0
    %1042 = vmatpush1.msra.mxu0 0.0
    %1043 = vmatprep.subr.mxu0 0.0
    %1044 = vmatpush1.msra.mxu0 0.0
    %1045 = vmatprep.subr.mxu0 0.0
    %1046 = vmatpush1.msra.mxu0 0.0
    %1047 = vmatprep.subr.mxu0 0.0
    %1048 = vmatpush1.msra.mxu0 0.0
    %1049 = vmatprep.subr.mxu0 0.0
    %1050 = vmatpush1.msra.mxu0 0.0
    %1051 = vmatprep.subr.mxu0 0.0
    %1052 = vmatpush1.msra.mxu0 0.0
    %1053 = vmatprep.subr.mxu0 0.0
    %1054 = vmatpush1.msra.mxu0 0.0
    %1055 = vmatprep.subr.mxu0 0.0
    %1056 = vmatpush1.msra.mxu0 0.0
    %1057 = vmatprep.subr.mxu0 0.0
    %1058 = vmatpush1.msra.mxu0 0.0
    %1059 = vmatprep.subr.mxu0 0.0
    %1060 = vmatpush1.msra.mxu0 0.0
    %1061 = vmatprep.subr.mxu0 0.0
    %1062 = vmatpush1.msra.mxu0 0.0
    %1063 = vmatprep.subr.mxu0 0.0
    %1064 = vmatpush1.msra.mxu0 0.0
    %1065 = vmatprep.subr.mxu0 0.0
    %1066 = vmatpush1.msra.mxu0 0.0
    %1067 = vmatprep.subr.mxu0 0.0
    %1068 = vmatpush1.msra.mxu0 0.0
    %1069 = vmatprep.mubr.f32.mxu0 0.0
    %1070 = vmatmul.mubr.f32.gmra.mrb[0].mxu0 %v1003
    %v1071 = vpop.f32.mrb[0].mxu0
    %v1072 = vadd.f32 0.0, %v1071
    %v1073 = vpop.f32.mrb[0].mxu0
    %1074 = vdwg.mxu0
    %v1075 = vadd.f32 %v239, %v1072
    %v1076 = vxor.u32 %v1075, 2147483648
    %v1077 = vmul.f32 %v1076, 1.442695
    %v1078 = vpow.pop %v1077
    %v1079 = vadd.f32 %v1078, 1.0
    %v1080 = vrcp.pop %v1079
    %v1081 = vmul.f32 1.0, %v1080
    %v1082 = vtanh.pop %v1075
    %v1083 = vmul.f32 %v1081, %v986
    %1085 = vrot.lane.b32.xlu0 %v1082, 64
    %v1086 = vpop.permute.xlu0 %1085
    %v1088 = vmul.f32 %v1081, %v1086
    %1090 = vrot.lane.b32.xlu0 %v1088, 32
    %v1091 = vpop.permute.xlu0 %1090
    %v1093 = vadd.f32 %v1083, %v1091
    %v1094 = vtanh.pop %v1093
    %1096 = vrot.lane.b32.xlu0 %v1094, 64
    %v1097 = vpop.permute.xlu0 %1096
    %v1099 = vmul.f32 %v1081, %v1097
    %v1100 = vld [vmem:[%s4] sm:$0x1]
    %v1102 = vlaneseq
    %v1103 = vshrl.u32 %v1102, 7
    %v1104 = vsub.s32 0, %v1103
    %v1105 = vrot.slane %v1100, %v1104
    %v1107 = vunpack.c.l.s4 1983009808
    %v1108 = vunpack.c.0.s8 %v1107
    %v1109 = vlaneseq
    %v1110 = vshrl.u32 %v1109, 7
    %v1111 = vsub.s32 %v1108, %v1110
    %v1112 = vrot.slane %v1105, %v1111
    %1113 = vrot.lane.b32.xlu0 %v1112, 96
    %v1114 = vpop.permute.xlu0 %1113
    %v1116 = vmul.f32 %v350, %v1114
    %v1117 = vmul.f32 %v457, %v1114
    %v1118 = vmul.f32 %v564, %v1114
    %v1119 = vmul.f32 %v671, %v1114
    %v1120 = vmul.f32 %v778, %v1114
    %v1121 = vmul.f32 %v885, %v1114
    %v1122 = vmul.f32 %v992, %v1114
    %v1123 = vmul.f32 %v1099, %v1114
    %v1133 = vunpack.c.l.s4 1983009808
    %v1134 = vunpack.c.0.s8 %v1133
    %v1135 = vlaneseq
    %v1136 = vshrl.u32 %v1135, 7
    %v1137 = vsub.s32 %v1134, %v1136
    %v1138 = vrot.slane %v1116, %v1137
    %v1140 = vunpack.c.l.s4 1983009808
    %v1141 = vunpack.c.0.s8 %v1140
    %v1142 = vlaneseq
    %v1143 = vshrl.u32 %v1142, 7
    %v1144 = vsub.s32 %v1141, %v1143
    %v1145 = vrot.slane %v1117, %v1144
    %v1147 = vunpack.c.l.s4 1983009808
    %v1148 = vunpack.c.0.s8 %v1147
    %v1149 = vlaneseq
    %v1150 = vshrl.u32 %v1149, 7
    %v1151 = vsub.s32 %v1148, %v1150
    %v1152 = vrot.slane %v1118, %v1151
    %v1154 = vunpack.c.l.s4 1983009808
    %v1155 = vunpack.c.0.s8 %v1154
    %v1156 = vlaneseq
    %v1157 = vshrl.u32 %v1156, 7
    %v1158 = vsub.s32 %v1155, %v1157
    %v1159 = vrot.slane %v1119, %v1158
    %v1161 = vunpack.c.l.s4 1983009808
    %v1162 = vunpack.c.0.s8 %v1161
    %v1163 = vlaneseq
    %v1164 = vshrl.u32 %v1163, 7
    %v1165 = vsub.s32 %v1162, %v1164
    %v1166 = vrot.slane %v1120, %v1165
    %v1168 = vunpack.c.l.s4 1983009808
    %v1169 = vunpack.c.0.s8 %v1168
    %v1170 = vlaneseq
    %v1171 = vshrl.u32 %v1170, 7
    %v1172 = vsub.s32 %v1169, %v1171
    %v1173 = vrot.slane %v1121, %v1172
    %v1175 = vunpack.c.l.s4 1983009808
    %v1176 = vunpack.c.0.s8 %v1175
    %v1177 = vlaneseq
    %v1178 = vshrl.u32 %v1177, 7
    %v1179 = vsub.s32 %v1176, %v1178
    %v1180 = vrot.slane %v1122, %v1179
    %v1182 = vunpack.c.l.s4 1983009808
    %v1183 = vunpack.c.0.s8 %v1182
    %v1184 = vlaneseq
    %v1185 = vshrl.u32 %v1184, 7
    %v1186 = vsub.s32 %v1183, %v1185
    %v1187 = vrot.slane %v1123, %v1186
    %1188 = vrot.lane.b32.xlu0 %v1138, 32
    %v1189 = vpop.permute.xlu0 %1188
    %1190 = vrot.lane.b32.xlu0 %v1145, 32
    %v1191 = vpop.permute.xlu0 %1190
    %1192 = vrot.lane.b32.xlu0 %v1152, 32
    %v1193 = vpop.permute.xlu0 %1192
    %1194 = vrot.lane.b32.xlu0 %v1159, 32
    %v1195 = vpop.permute.xlu0 %1194
    %1196 = vrot.lane.b32.xlu0 %v1166, 32
    %v1197 = vpop.permute.xlu0 %1196
    %1198 = vrot.lane.b32.xlu0 %v1173, 32
    %v1199 = vpop.permute.xlu0 %1198
    %1200 = vrot.lane.b32.xlu0 %v1180, 32
    %v1201 = vpop.permute.xlu0 %1200
    %1202 = vrot.lane.b32.xlu0 %v1187, 32
    %v1203 = vpop.permute.xlu0 %1202
    %vm1212 = vcmask 254976
    %v1213 = vsel %vm1212, %v1189, 0.0
    %1214 = vadd.xlane.f32.xlu0 %v1213
    %v1215 = vpop.xlane.xlu0 %1214
    %v1216 = vsel %vm1212, %v1191, 0.0
    %1217 = vadd.xlane.f32.xlu0 %v1216
    %v1218 = vpop.xlane.xlu0 %1217
    %v1219 = vsel %vm1212, %v1193, 0.0
    %1220 = vadd.xlane.f32.xlu0 %v1219
    %v1221 = vpop.xlane.xlu0 %1220
    %v1222 = vsel %vm1212, %v1195, 0.0
    %1223 = vadd.xlane.f32.xlu0 %v1222
    %v1224 = vpop.xlane.xlu0 %1223
    %v1225 = vsel %vm1212, %v1197, 0.0
    %1226 = vadd.xlane.f32.xlu0 %v1225
    %v1227 = vpop.xlane.xlu0 %1226
    %v1228 = vsel %vm1212, %v1199, 0.0
    %1229 = vadd.xlane.f32.xlu0 %v1228
    %v1230 = vpop.xlane.xlu0 %1229
    %v1231 = vsel %vm1212, %v1201, 0.0
    %1232 = vadd.xlane.f32.xlu0 %v1231
    %v1233 = vpop.xlane.xlu0 %1232
    %v1234 = vsel %vm1212, %v1203, 0.0
    %1235 = vadd.xlane.f32.xlu0 %v1234
    %v1236 = vpop.xlane.xlu0 %1235
    %v1237 = vld [vmem:[#allocation2] sm:$0x1]
    %v1239 = vlaneseq
    %v1240 = vshrl.u32 %v1239, 7
    %v1241 = vsub.s32 0, %v1240
    %v1242 = vrot.slane %v1237, %v1241
    %v1244 = vadd.f32 %v1215, %v1242
    %v1245 = vadd.f32 %v1218, %v1242
    %v1246 = vadd.f32 %v1221, %v1242
    %v1247 = vadd.f32 %v1224, %v1242
    %v1248 = vadd.f32 %v1227, %v1242
    %v1249 = vadd.f32 %v1230, %v1242
    %v1250 = vadd.f32 %v1233, %v1242
    %v1251 = vadd.f32 %v1236, %v1242
    %v1252 = vtanh.pop %v1244
    %v1253 = vtanh.pop %v1245
    %v1254 = vtanh.pop %v1246
    %v1255 = vtanh.pop %v1247
    %v1256 = vtanh.pop %v1248
    %v1257 = vtanh.pop %v1249
    %v1258 = vtanh.pop %v1250
    %v1259 = vtanh.pop %v1251
    %v1260 = vmul.f32 %v1252, 1.442695
    %v1261 = vpow.pop %v1260
    %v1262 = vmul.f32 %v1253, 1.442695
    %v1263 = vpow.pop %v1262
    %v1264 = vmul.f32 %v1254, 1.442695
    %v1265 = vpow.pop %v1264
    %v1266 = vmul.f32 %v1255, 1.442695
    %v1267 = vpow.pop %v1266
    %v1268 = vmul.f32 %v1256, 1.442695
    %v1269 = vpow.pop %v1268
    %v1270 = vmul.f32 %v1257, 1.442695
    %v1271 = vpow.pop %v1270
    %v1272 = vmul.f32 %v1258, 1.442695
    %v1273 = vpow.pop %v1272
    %v1274 = vmul.f32 %v1259, 1.442695
    %v1275 = vpow.pop %v1274
    %vm1276 = vcmask 1024
    %v1277 = vsel %vm1276, %v1261, 0.0
    %v1278 = vrot.slane %v1277, 4
    %v1279 = vadd.f32 %v1277, %v1278
    %v1280 = vrot.slane %v1279, 2
    %v1281 = vadd.f32 %v1279, %v1280
    %v1282 = vrot.slane %v1281, 1
    %v1283 = vadd.f32 %v1281, %v1282
    %v1284 = vsel %vm1276, %v1263, 0.0
    %v1285 = vrot.slane %v1284, 4
    %v1286 = vadd.f32 %v1284, %v1285
    %v1287 = vrot.slane %v1286, 2
    %v1288 = vadd.f32 %v1286, %v1287
    %v1289 = vrot.slane %v1288, 1
    %v1290 = vadd.f32 %v1288, %v1289
    %v1291 = vsel %vm1276, %v1265, 0.0
    %v1292 = vrot.slane %v1291, 4
    %v1293 = vadd.f32 %v1291, %v1292
    %v1294 = vrot.slane %v1293, 2
    %v1295 = vadd.f32 %v1293, %v1294
    %v1296 = vrot.slane %v1295, 1
    %v1297 = vadd.f32 %v1295, %v1296
    %v1298 = vsel %vm1276, %v1267, 0.0
    %v1299 = vrot.slane %v1298, 4
    %v1300 = vadd.f32 %v1298, %v1299
    %v1301 = vrot.slane %v1300, 2
    %v1302 = vadd.f32 %v1300, %v1301
    %v1303 = vrot.slane %v1302, 1
    %v1304 = vadd.f32 %v1302, %v1303
    %v1305 = vsel %vm1276, %v1269, 0.0
    %v1306 = vrot.slane %v1305, 4
    %v1307 = vadd.f32 %v1305, %v1306
    %v1308 = vrot.slane %v1307, 2
    %v1309 = vadd.f32 %v1307, %v1308
    %v1310 = vrot.slane %v1309, 1
    %v1311 = vadd.f32 %v1309, %v1310
    %v1312 = vsel %vm1276, %v1271, 0.0
    %v1313 = vrot.slane %v1312, 4
    %v1314 = vadd.f32 %v1312, %v1313
    %v1315 = vrot.slane %v1314, 2
    %v1316 = vadd.f32 %v1314, %v1315
    %v1317 = vrot.slane %v1316, 1
    %v1318 = vadd.f32 %v1316, %v1317
    %v1319 = vsel %vm1276, %v1273, 0.0
    %v1320 = vrot.slane %v1319, 4
    %v1321 = vadd.f32 %v1319, %v1320
    %v1322 = vrot.slane %v1321, 2
    %v1323 = vadd.f32 %v1321, %v1322
    %v1324 = vrot.slane %v1323, 1
    %v1325 = vadd.f32 %v1323, %v1324
    %v1326 = vsel %vm1276, %v1275, 0.0
    %v1327 = vrot.slane %v1326, 4
    %v1328 = vadd.f32 %v1326, %v1327
    %v1329 = vrot.slane %v1328, 2
    %v1330 = vadd.f32 %v1328, %v1329
    %v1331 = vrot.slane %v1330, 1
    %v1332 = vadd.f32 %v1330, %v1331
    %v1333 = vrcp.pop %v1283
    %v1334 = vrcp.pop %v1290
    %v1335 = vrcp.pop %v1297
    %v1336 = vrcp.pop %v1304
    %v1337 = vrcp.pop %v1311
    %v1338 = vrcp.pop %v1318
    %v1339 = vrcp.pop %v1325
    %v1340 = vrcp.pop %v1332
    %v1341 = vmul.f32 %v1261, %v1333
    %v1342 = vmul.f32 %v1263, %v1334
    %v1343 = vmul.f32 %v1265, %v1335
    %v1344 = vmul.f32 %v1267, %v1336
    %v1345 = vmul.f32 %v1269, %v1337
    %v1346 = vmul.f32 %v1271, %v1338
    %v1347 = vmul.f32 %v1273, %v1339
    %v1348 = vmul.f32 %v1275, %v1340
    %1350 = vset.pattern.permute.xlu0 0
    %1351 = vperm.xlu0 %1350, %v1341
    %v1352 = vpop.permute.xlu0 %1351
    %1355 = vset.pattern.permute.xlu0 0
    %1356 = vperm.xlu0 %1355, %v1342
    %v1357 = vpop.permute.xlu0 %1356
    %1360 = vset.pattern.permute.xlu0 0
    %1361 = vperm.xlu0 %1360, %v1343
    %v1362 = vpop.permute.xlu0 %1361
    %1365 = vset.pattern.permute.xlu0 0
    %1366 = vperm.xlu0 %1365, %v1344
    %v1367 = vpop.permute.xlu0 %1366
    %1370 = vset.pattern.permute.xlu0 0
    %1371 = vperm.xlu0 %1370, %v1345
    %v1372 = vpop.permute.xlu0 %1371
    %1375 = vset.pattern.permute.xlu0 0
    %1376 = vperm.xlu0 %1375, %v1346
    %v1377 = vpop.permute.xlu0 %1376
    %1380 = vset.pattern.permute.xlu0 0
    %1381 = vperm.xlu0 %1380, %v1347
    %v1382 = vpop.permute.xlu0 %1381
    %1385 = vset.pattern.permute.xlu0 0
    %1386 = vperm.xlu0 %1385, %v1348
    %v1387 = vpop.permute.xlu0 %1386
    %v1391 = vunpack.c.l.s4 1983009808
    %v1392 = vunpack.c.0.s8 %v1391
    %v1393 = vlaneseq
    %v1394 = vshrl.u32 %v1393, 7
    %v1395 = vsub.s32 %v1392, %v1394
    %v1396 = vrot.slane %v1099, %v1395
    %1397 = vrot.lane.b32.xlu0 %v1396, 32
    %v1398 = vpop.permute.xlu0 %1397
    %v1407 = vmul.f32 %v1352, %v360
    %v1408 = vmul.f32 %v1357, %v467
    %v1409 = vmul.f32 %v1362, %v574
    %v1410 = vmul.f32 %v1367, %v681
    %v1411 = vmul.f32 %v1372, %v788
    %v1412 = vmul.f32 %v1377, %v895
    %v1413 = vmul.f32 %v1382, %v1002
    %v1414 = vmul.f32 %v1387, %v1398
    %v1415 = vsel %vm1212, %v1407, 0.0
    %v1416 = vrot.slane %v1415, 4
    %v1417 = vadd.f32 %v1415, %v1416
    %v1418 = vrot.slane %v1417, 2
    %v1419 = vadd.f32 %v1417, %v1418
    %v1420 = vrot.slane %v1419, 1
    %v1421 = vadd.f32 %v1419, %v1420
    %v1422 = vsel %vm1212, %v1408, 0.0
    %v1423 = vrot.slane %v1422, 4
    %v1424 = vadd.f32 %v1422, %v1423
    %v1425 = vrot.slane %v1424, 2
    %v1426 = vadd.f32 %v1424, %v1425
    %v1427 = vrot.slane %v1426, 1
    %v1428 = vadd.f32 %v1426, %v1427
    %v1429 = vsel %vm1212, %v1409, 0.0
    %v1430 = vrot.slane %v1429, 4
    %v1431 = vadd.f32 %v1429, %v1430
    %v1432 = vrot.slane %v1431, 2
    %v1433 = vadd.f32 %v1431, %v1432
    %v1434 = vrot.slane %v1433, 1
    %v1435 = vadd.f32 %v1433, %v1434
    %v1436 = vsel %vm1212, %v1410, 0.0
    %v1437 = vrot.slane %v1436, 4
    %v1438 = vadd.f32 %v1436, %v1437
    %v1439 = vrot.slane %v1438, 2
    %v1440 = vadd.f32 %v1438, %v1439
    %v1441 = vrot.slane %v1440, 1
    %v1442 = vadd.f32 %v1440, %v1441
    %v1443 = vsel %vm1212, %v1411, 0.0
    %v1444 = vrot.slane %v1443, 4
    %v1445 = vadd.f32 %v1443, %v1444
    %v1446 = vrot.slane %v1445, 2
    %v1447 = vadd.f32 %v1445, %v1446
    %v1448 = vrot.slane %v1447, 1
    %v1449 = vadd.f32 %v1447, %v1448
    %v1450 = vsel %vm1212, %v1412, 0.0
    %v1451 = vrot.slane %v1450, 4
    %v1452 = vadd.f32 %v1450, %v1451
    %v1453 = vrot.slane %v1452, 2
    %v1454 = vadd.f32 %v1452, %v1453
    %v1455 = vrot.slane %v1454, 1
    %v1456 = vadd.f32 %v1454, %v1455
    %v1457 = vsel %vm1212, %v1413, 0.0
    %v1458 = vrot.slane %v1457, 4
    %v1459 = vadd.f32 %v1457, %v1458
    %v1460 = vrot.slane %v1459, 2
    %v1461 = vadd.f32 %v1459, %v1460
    %v1462 = vrot.slane %v1461, 1
    %v1463 = vadd.f32 %v1461, %v1462
    %v1464 = vsel %vm1212, %v1414, 0.0
    %v1465 = vrot.slane %v1464, 4
    %v1466 = vadd.f32 %v1464, %v1465
    %v1467 = vrot.slane %v1466, 2
    %v1468 = vadd.f32 %v1466, %v1467
    %v1469 = vrot.slane %v1468, 1
    %v1470 = vadd.f32 %v1468, %v1469
    %v1471 = vld [vmem:[#allocation5] sm:$0xff]
    %v1472 = vld [vmem:[#allocation5 + $0x8] sm:$0xff]
    %v1473 = vld [vmem:[#allocation5 + $0x10] sm:$0xff]
    %v1474 = vld [vmem:[#allocation5 + $0x18] sm:$0xff]
    %v1475 = vld [vmem:[%s7] sm:$0x1]
    %v1477 = vlaneseq
    %v1478 = vshrl.u32 %v1477, 7
    %v1479 = vsub.s32 0, %v1478
    %v1480 = vrot.slane %v1475, %v1479
    %vm1490 = vcmask 1041409
    %v1491 = vsel %vm1490, %v1428, %v1421
    %vm1492 = vcmask 1042434
    %v1493 = vsel %vm1492, %v1435, %v1491
    %vm1494 = vcmask 1043459
    %v1495 = vsel %vm1494, %v1442, %v1493
    %vm1496 = vcmask 1044484
    %v1497 = vsel %vm1496, %v1449, %v1495
    %vm1498 = vcmask 1045509
    %v1499 = vsel %vm1498, %v1456, %v1497
    %vm1500 = vcmask 1046534
    %v1501 = vsel %vm1500, %v1463, %v1499
    %vm1502 = vcmask 1047559
    %v1503 = vsel %vm1502, %v1470, %v1501
    %v1504 = vsel %vm252, %v1503, 0
    %1506 = vmatprep.subr.mxu0 0.0
    %1507 = vmatpush1.msra.mxu0 %v1471
    %1508 = vmatprep.subr.mxu0 0.0
    %1509 = vmatpush1.msra.mxu0 %v1472
    %1510 = vmatprep.subr.mxu0 0.0
    %1511 = vmatpush1.msra.mxu0 %v1473
    %1512 = vmatprep.subr.mxu0 0.0
    %1513 = vmatpush1.msra.mxu0 %v1474
    %1514 = vmatprep.subr.mxu0 0.0
    %1515 = vmatpush1.msra.mxu0 0.0
    %1516 = vmatprep.subr.mxu0 0.0
    %1517 = vmatpush1.msra.mxu0 0.0
    %1518 = vmatprep.subr.mxu0 0.0
    %1519 = vmatpush1.msra.mxu0 0.0
    %1520 = vmatprep.subr.mxu0 0.0
    %1521 = vmatpush1.msra.mxu0 0.0
    %1522 = vmatprep.subr.mxu0 0.0
    %1523 = vmatpush1.msra.mxu0 0.0
    %1524 = vmatprep.subr.mxu0 0.0
    %1525 = vmatpush1.msra.mxu0 0.0
    %1526 = vmatprep.subr.mxu0 0.0
    %1527 = vmatpush1.msra.mxu0 0.0
    %1528 = vmatprep.subr.mxu0 0.0
    %1529 = vmatpush1.msra.mxu0 0.0
    %1530 = vmatprep.subr.mxu0 0.0
    %1531 = vmatpush1.msra.mxu0 0.0
    %1532 = vmatprep.subr.mxu0 0.0
    %1533 = vmatpush1.msra.mxu0 0.0
    %1534 = vmatprep.subr.mxu0 0.0
    %1535 = vmatpush1.msra.mxu0 0.0
    %1536 = vmatprep.subr.mxu0 0.0
    %1537 = vmatpush1.msra.mxu0 0.0
    %1538 = vmatprep.subr.mxu0 0.0
    %1539 = vmatpush1.msra.mxu0 0.0
    %1540 = vmatprep.subr.mxu0 0.0
    %1541 = vmatpush1.msra.mxu0 0.0
    %1542 = vmatprep.subr.mxu0 0.0
    %1543 = vmatpush1.msra.mxu0 0.0
    %1544 = vmatprep.subr.mxu0 0.0
    %1545 = vmatpush1.msra.mxu0 0.0
    %1546 = vmatprep.subr.mxu0 0.0
    %1547 = vmatpush1.msra.mxu0 0.0
    %1548 = vmatprep.subr.mxu0 0.0
    %1549 = vmatpush1.msra.mxu0 0.0
    %1550 = vmatprep.subr.mxu0 0.0
    %1551 = vmatpush1.msra.mxu0 0.0
    %1552 = vmatprep.subr.mxu0 0.0
    %1553 = vmatpush1.msra.mxu0 0.0
    %1554 = vmatprep.subr.mxu0 0.0
    %1555 = vmatpush1.msra.mxu0 0.0
    %1556 = vmatprep.subr.mxu0 0.0
    %1557 = vmatpush1.msra.mxu0 0.0
    %1558 = vmatprep.subr.mxu0 0.0
    %1559 = vmatpush1.msra.mxu0 0.0
    %1560 = vmatprep.subr.mxu0 0.0
    %1561 = vmatpush1.msra.mxu0 0.0
    %1562 = vmatprep.subr.mxu0 0.0
    %1563 = vmatpush1.msra.mxu0 0.0
    %1564 = vmatprep.subr.mxu0 0.0
    %1565 = vmatpush1.msra.mxu0 0.0
    %1566 = vmatprep.subr.mxu0 0.0
    %1567 = vmatpush1.msra.mxu0 0.0
    %1568 = vmatprep.subr.mxu0 0.0
    %1569 = vmatpush1.msra.mxu0 0.0
    %1570 = vmatprep.mubr.f32.mxu0 0.0
    %1571 = vmatmul.mubr.f32.gmra.mrb[0].mxu0 %v1504
    %v1572 = vpop.f32.mrb[0].mxu0
    %v1573 = vadd.f32 %v1480, %v1572
    %v1574 = vpop.f32.mrb[0].mxu0
    %1575 = vdwg.mxu0
    %v1576 = vmax.f32 %v1573, 0.0
    %v1577 = vld [vmem:[%s8] sm:$0xff]
    %v1578 = vld [vmem:[%s8 + $0x8] sm:$0xff]
    %v1579 = vld [vmem:[%s8 + $0x10] sm:$0xff]
    %v1580 = vld [vmem:[%s8 + $0x18] sm:$0xff]
    %v1581 = vld [vmem:[%s9] sm:$0x1]
    %v1583 = vlaneseq
    %v1584 = vshrl.u32 %v1583, 7
    %v1585 = vsub.s32 0, %v1584
    %v1586 = vrot.slane %v1581, %v1585
    %v1589 = vsel %vm252, %v1576, 0
    %1591 = vmatprep.subr.mxu0 0.0
    %1592 = vmatpush1.msra.mxu0 %v1577
    %1593 = vmatprep.subr.mxu0 0.0
    %1594 = vmatpush1.msra.mxu0 %v1578
    %1595 = vmatprep.subr.mxu0 0.0
    %1596 = vmatpush1.msra.mxu0 %v1579
    %1597 = vmatprep.subr.mxu0 0.0
    %1598 = vmatpush1.msra.mxu0 %v1580
    %1599 = vmatprep.subr.mxu0 0.0
    %1600 = vmatpush1.msra.mxu0 0.0
    %1601 = vmatprep.subr.mxu0 0.0
    %1602 = vmatpush1.msra.mxu0 0.0
    %1603 = vmatprep.subr.mxu0 0.0
    %1604 = vmatpush1.msra.mxu0 0.0
    %1605 = vmatprep.subr.mxu0 0.0
    %1606 = vmatpush1.msra.mxu0 0.0
    %1607 = vmatprep.subr.mxu0 0.0
    %1608 = vmatpush1.msra.mxu0 0.0
    %1609 = vmatprep.subr.mxu0 0.0
    %1610 = vmatpush1.msra.mxu0 0.0
    %1611 = vmatprep.subr.mxu0 0.0
    %1612 = vmatpush1.msra.mxu0 0.0
    %1613 = vmatprep.subr.mxu0 0.0
    %1614 = vmatpush1.msra.mxu0 0.0
    %1615 = vmatprep.subr.mxu0 0.0
    %1616 = vmatpush1.msra.mxu0 0.0
    %1617 = vmatprep.subr.mxu0 0.0
    %1618 = vmatpush1.msra.mxu0 0.0
    %1619 = vmatprep.subr.mxu0 0.0
    %1620 = vmatpush1.msra.mxu0 0.0
    %1621 = vmatprep.subr.mxu0 0.0
    %1622 = vmatpush1.msra.mxu0 0.0
    %1623 = vmatprep.subr.mxu0 0.0
    %1624 = vmatpush1.msra.mxu0 0.0
    %1625 = vmatprep.subr.mxu0 0.0
    %1626 = vmatpush1.msra.mxu0 0.0
    %1627 = vmatprep.subr.mxu0 0.0
    %1628 = vmatpush1.msra.mxu0 0.0
    %1629 = vmatprep.subr.mxu0 0.0
    %1630 = vmatpush1.msra.mxu0 0.0
    %1631 = vmatprep.subr.mxu0 0.0
    %1632 = vmatpush1.msra.mxu0 0.0
    %1633 = vmatprep.subr.mxu0 0.0
    %1634 = vmatpush1.msra.mxu0 0.0
    %1635 = vmatprep.subr.mxu0 0.0
    %1636 = vmatpush1.msra.mxu0 0.0
    %1637 = vmatprep.subr.mxu0 0.0
    %1638 = vmatpush1.msra.mxu0 0.0
    %1639 = vmatprep.subr.mxu0 0.0
    %1640 = vmatpush1.msra.mxu0 0.0
    %1641 = vmatprep.subr.mxu0 0.0
    %1642 = vmatpush1.msra.mxu0 0.0
    %1643 = vmatprep.subr.mxu0 0.0
    %1644 = vmatpush1.msra.mxu0 0.0
    %1645 = vmatprep.subr.mxu0 0.0
    %1646 = vmatpush1.msra.mxu0 0.0
    %1647 = vmatprep.subr.mxu0 0.0
    %1648 = vmatpush1.msra.mxu0 0.0
    %1649 = vmatprep.subr.mxu0 0.0
    %1650 = vmatpush1.msra.mxu0 0.0
    %1651 = vmatprep.subr.mxu0 0.0
    %1652 = vmatpush1.msra.mxu0 0.0
    %1653 = vmatprep.subr.mxu0 0.0
    %1654 = vmatpush1.msra.mxu0 0.0
    %1655 = vmatprep.mubr.f32.mxu0 0.0
    %1656 = vmatmul.mubr.f32.gmra.mrb[0].mxu0 %v1589
    %v1657 = vpop.f32.mrb[0].mxu0
    %v1658 = vadd.f32 %v1586, %v1657
    %v1659 = vpop.f32.mrb[0].mxu0
    %1660 = vdwg.mxu0
    %vm1661 = vcmask 31744
    %1662 = vst.msk [vmem:[%s10] sm:$0xff] %vm1661, %v1658
    // Predicated region
    $region50: #{tpu_custom_call.1} parent=1 // pred_check
      _
    $region51: #{tpu_custom_call.1} parent=1 // pred_check_branch
      %1664 = sbr.rel (0) target = $region53
    $region52: #{tpu_custom_call.1} parent=1 // pred_region
      _
    $region53: #{tpu_custom_call.1} parent=1 // pred_fallthru
      _
    // Predicated region
    $region54: #{tpu_custom_call.1} parent=1 // pred_check
      _
    $region55: #{tpu_custom_call.1} parent=1 // pred_check_branch
      %1666 = sbr.rel (0) target = $region57
    $region56: #{tpu_custom_call.1} parent=1 // pred_region
      _
    $region57: #{tpu_custom_call.1} parent=1 // pred_fallthru
      _
    %1667 = vsyncpa [#allocation4], 1
    %1668 = vsyncpa [#allocation6], 1

</llo_original>
